<compile_context>
chip_gen: v7x
topology: tpu7x:2x2x1
jax: 0.10.0
libtpu: 0.0.40
codegen_flags: <defaults>
</compile_context>

<pallas_src>
import functools

import jax
import jax.numpy as jnp
from jax.experimental import pallas as pl
from jax.experimental.pallas import tpu as pltpu

EPS = 1e-5  # nn.LayerNorm default eps


def _sal_token_kernel(fea_ref, gamma_ref, beta_ref, wkq_ref, wvp_ref, bp_ref,
                      out_ref, *, block_b, n_tokens):
    """Processes `block_b` batch elements; all per-element math is 2-D."""
    f32 = jnp.float32
    n_win = n_tokens - 2
    gamma = gamma_ref[...]                      # (1, C) f32
    beta = beta_ref[...]                        # (1, C) f32
    bp = bp_ref[...]                            # (1, C) f32
    w_kq = wkq_ref[...]                         # (C, C) f32, scale folded in
    w_vp = wvp_ref[...]                         # (C, C) f32

    for i in range(block_b):                    # static unroll (block_b small)
        # --- saliency token (row 0): two-pass LayerNorm -----------------------
        t0 = fea_ref[i, 0:1, :].astype(f32)                        # (1, C)
        mu0 = jnp.mean(t0, axis=-1, keepdims=True)
        d0 = t0 - mu0
        var0 = jnp.mean(d0 * d0, axis=-1, keepdims=True)
        t_s = d0 * jax.lax.rsqrt(var0 + EPS) * gamma + beta        # (1, C)

        # --- rank-1 projections through the pre-fused weight chains -----------
        qk = jnp.dot(t_s, w_kq, preferred_element_type=f32)        # (1, C)
        vp = jnp.dot(t_s, w_vp, preferred_element_type=f32)        # (1, C)

        # --- patch-token window rows [1 : N-1]: LayerNorm + token attention ---
        xw = fea_ref[i, 1:n_tokens - 1, :].astype(f32)             # (N-2, C)
        mu = jnp.mean(xw, axis=-1, keepdims=True)
        d = xw - mu
        var = jnp.mean(d * d, axis=-1, keepdims=True)
        xn = d * jax.lax.rsqrt(var + EPS) * gamma + beta           # (N-2, C)

        attn = jax.nn.sigmoid(
            jnp.sum(xn * qk, axis=-1, keepdims=True))              # (N-2, 1)
        # attn_drop / proj_drop have p = 0.0 (eval mode) -> identity

        # residual: re-read the raw window so the f32 copy stays short-lived
        res = fea_ref[i, 1:n_tokens - 1, :].astype(f32)            # (N-2, C)
        out_ref[i] = (attn * vp + bp + res).astype(out_ref.dtype)


def _choose_block_batch(B, N, C, in_itemsize, out_itemsize, *,
                        target_step_bytes=2 << 20, max_unroll=8):
    """Batch elements per grid step.

    Amortizes the ~0.35us/step fixed overhead when per-batch blocks are tiny,
    while keeping the unrolled in-kernel loop short and the streamed VMEM
    footprint modest when per-batch blocks are already large.
    """
    per_b = N * C * in_itemsize + (N - 2) * C * out_itemsize
    bb = max(1, min(B, max_unroll, target_step_bytes // per_b))
    while B % bb:
        bb -= 1
    return int(bb)


def _vmem_limit_bytes(block_b, N, C, in_itemsize, out_itemsize):
    """Explicit VMEM accounting: streamed blocks (double-buffered), constant
    operands (double-buffered), f32 temporaries, plus compiler slack."""
    streamed = 2 * block_b * (N * C * in_itemsize + (N - 2) * C * out_itemsize)
    consts = 2 * (2 * C * C * 4 + 3 * 8 * max(C, 128) * 4)
    working = 6 * N * C * 4
    need = streamed + consts + working + (4 << 20)
    try:
        phys = int(pltpu.get_tpu_info().vmem_capacity_bytes)   # 64 MiB (v7x) .. 128 MiB
    except Exception:
        phys = 64 << 20
    return int(min(max(need, 32 << 20), (phys * 3) // 4))


def saliency_token_inference(fea, params, *, num_heads=1, block_batch=None):
    """fea: (B, N, C). Returns (B, N-2, C), matching the PyTorch module (eval)."""
    B, N, C = fea.shape
    # TODO(synk): multi-head (num_heads > 1) path not implemented; the rank-1
    #             rewrite would become rank-num_heads.
    assert num_heads == 1, "kernel implements the module default num_heads=1"
    scale = (C // num_heads) ** (-0.5)
    f32 = jnp.float32
    hp = jax.lax.Precision.HIGHEST

    gamma = params["ln_gamma"].astype(f32).reshape(1, C)
    beta = params["ln_beta"].astype(f32).reshape(1, C)
    bp = params["bp"].astype(f32).reshape(1, C)
    # PyTorch Linear computes y = x @ W.T.  Fuse the constant weight chains:
    #   qk = t_s @ (Wk^T @ Wq) * scale     (scores = F_s . qk)
    #   vp = t_s @ (Wv^T @ Wp^T)           (proj(attn @ v) = attn * vp + b_p)
    w_kq = jnp.dot(params["wk"].astype(f32).T, params["wq"].astype(f32),
                   precision=hp) * scale
    w_vp = jnp.dot(params["wv"].astype(f32).T, params["wp"].astype(f32).T,
                   precision=hp)

    in_item = jnp.dtype(fea.dtype).itemsize
    if block_batch is None:
        block_batch = _choose_block_batch(B, N, C, in_item, in_item)
    Bb = int(block_batch)
    assert B % Bb == 0, (B, Bb)

    kernel = functools.partial(_sal_token_kernel, block_b=Bb, n_tokens=N)
    const_spec = pl.BlockSpec((1, C), lambda b: (0, 0))
    mat_spec = pl.BlockSpec((C, C), lambda b: (0, 0))

    return pl.pallas_call(
        kernel,
        out_shape=jax.ShapeDtypeStruct((B, N - 2, C), fea.dtype),
        grid_spec=pltpu.PrefetchScalarGridSpec(
            num_scalar_prefetch=0,
            grid=(B // Bb,),
            in_specs=[
                pl.BlockSpec((Bb, N, C), lambda b: (b, 0, 0)),   # fea block
                const_spec,                                       # gamma
                const_spec,                                       # beta
                mat_spec,                                         # W_kq (scaled)
                mat_spec,                                         # W_vp
                const_spec,                                       # proj bias
            ],
            out_specs=pl.BlockSpec((Bb, N - 2, C), lambda b: (b, 0, 0)),
        ),
        compiler_params=pltpu.CompilerParams(
            dimension_semantics=("parallel",),
            vmem_limit_bytes=_vmem_limit_bytes(Bb, N, C, in_item, in_item)),
    )(fea, gamma, beta, w_kq, w_vp, bp)


def _reference(fea, params, *, num_heads=1):
    """Pure-JAX reference mirroring the PyTorch forward (eval mode)."""
    B, N, C = fea.shape
    scale = (C // num_heads) ** (-0.5)
    hp = jax.lax.Precision.HIGHEST
    mean = jnp.mean(fea, axis=-1, keepdims=True)
    var = jnp.mean((fea - mean) ** 2, axis=-1, keepdims=True)
    x = (fea - mean) / jnp.sqrt(var + EPS)
    x = x * params["ln_gamma"] + params["ln_beta"]
    t_s = x[:, 0:1, :]
    f_s = x[:, 1:-1, :]
    q = jnp.einsum("bnc,dc->bnd", f_s, params["wq"], precision=hp)
    k = jnp.einsum("bnc,dc->bnd", t_s, params["wk"], precision=hp)
    v = jnp.einsum("bnc,dc->bnd", t_s, params["wv"], precision=hp)
    attn = jax.nn.sigmoid(jnp.einsum("bnd,bmd->bnm", q, k, precision=hp) * scale)
    infer = jnp.einsum("bnm,bmd->bnd", attn, v, precision=hp)
    infer = jnp.einsum("bnd,cd->bnc", infer, params["wp"], precision=hp) + params["bp"]
    return infer + fea[:, 1:-1, :]


def make_params(key, dim):
    ks = jax.random.split(key, 5)
    s = dim ** (-0.5)
    return {
        "ln_gamma": jnp.ones((dim,), jnp.float32),
        "ln_beta": jnp.zeros((dim,), jnp.float32),
        "wq": jax.random.uniform(ks[0], (dim, dim), jnp.float32, -s, s),
        "wk": jax.random.uniform(ks[1], (dim, dim), jnp.float32, -s, s),
        "wv": jax.random.uniform(ks[2], (dim, dim), jnp.float32, -s, s),
        "wp": jax.random.uniform(ks[3], (dim, dim), jnp.float32, -s, s),
        "bp": jax.random.uniform(ks[4], (dim,), jnp.float32, -s, s),
    }


if __name__ == "__main__":
    key = jax.random.PRNGKey(0)
    k_fea, k_par = jax.random.split(key)

    # N = 16 patch tokens + saliency token + contour token
    B, N, C = 8, 18, 32
    fea = jax.random.normal(k_fea, (B, N, C), jnp.float32)
    params = make_params(k_par, C)

    out = saliency_token_inference(fea, params)   # block_batch=8 -> single grid step
    out = jax.block_until_ready(out)
    assert out.shape == (B, N - 2, C), out.shape

    ref = _reference(fea, params)
    # Tolerance sized to absorb MXU f32-matmul pass rounding inside the kernel
    # vs. the HIGHEST-precision pure-JAX reference; outputs are O(1), so any
    # algorithmic error (wrong window / weights) would be orders larger.
    err = float(jnp.max(jnp.abs(out - ref)))
    assert jnp.allclose(out, ref, atol=5e-3, rtol=5e-3), err

    print("KERNEL_OK")
</pallas_src>

<mosaic_0001>
module attributes {stable_mosaic.version = 11 : i64} {
  func.func @_sal_token_kernel(%arg0: i32, %arg1: memref<8x18x32xf32, #tpu.memory_space<vmem>>, %arg2: memref<1x32xf32, #tpu.memory_space<vmem>>, %arg3: memref<1x32xf32, #tpu.memory_space<vmem>>, %arg4: memref<32x32xf32, #tpu.memory_space<vmem>>, %arg5: memref<32x32xf32, #tpu.memory_space<vmem>>, %arg6: memref<1x32xf32, #tpu.memory_space<vmem>>, %arg7: memref<8x16x32xf32, #tpu.memory_space<vmem>>) attributes {dimension_semantics = [#tpu.dimension_semantics<parallel>], iteration_bounds = array<i64: 1>, scalar_prefetch = 0 : i64, scratch_operands = 0 : i64, tpu.core_type = #tpu.core_type<tc>, window_params = [{transform_indices = @transform_0, window_bounds = array<i64: 8, 18, 32>}, {pipeline_mode = #tpu.pipeline_mode<synchronous>, transform_indices = @transform_1, window_bounds = array<i64: 1, 32>}, {pipeline_mode = #tpu.pipeline_mode<synchronous>, transform_indices = @transform_2, window_bounds = array<i64: 1, 32>}, {pipeline_mode = #tpu.pipeline_mode<synchronous>, transform_indices = @transform_3, window_bounds = array<i64: 32, 32>}, {pipeline_mode = #tpu.pipeline_mode<synchronous>, transform_indices = @transform_4, window_bounds = array<i64: 32, 32>}, {pipeline_mode = #tpu.pipeline_mode<synchronous>, transform_indices = @transform_5, window_bounds = array<i64: 1, 32>}, {transform_indices = @transform_6, window_bounds = array<i64: 8, 16, 32>}]} {
    %c0 = arith.constant 0 : index
    %c0_0 = arith.constant 0 : index
    %0 = vector.load %arg2[%c0, %c0_0] : memref<1x32xf32, #tpu.memory_space<vmem>>, vector<1x32xf32>
    %c0_1 = arith.constant 0 : index
    %c0_2 = arith.constant 0 : index
    %1 = vector.load %arg3[%c0_1, %c0_2] : memref<1x32xf32, #tpu.memory_space<vmem>>, vector<1x32xf32>
    %c0_3 = arith.constant 0 : index
    %c0_4 = arith.constant 0 : index
    %2 = vector.load %arg6[%c0_3, %c0_4] : memref<1x32xf32, #tpu.memory_space<vmem>>, vector<1x32xf32>
    %c0_5 = arith.constant 0 : index
    %c0_6 = arith.constant 0 : index
    %3 = vector.load %arg4[%c0_5, %c0_6] : memref<32x32xf32, #tpu.memory_space<vmem>>, vector<32x32xf32>
    %c0_7 = arith.constant 0 : index
    %c0_8 = arith.constant 0 : index
    %4 = vector.load %arg5[%c0_7, %c0_8] : memref<32x32xf32, #tpu.memory_space<vmem>>, vector<32x32xf32>
    %c0_9 = arith.constant 0 : index
    %c0_10 = arith.constant 0 : index
    %c0_11 = arith.constant 0 : index
    %5 = vector.load %arg1[%c0_9, %c0_10, %c0_11] : memref<8x18x32xf32, #tpu.memory_space<vmem>>, vector<1x1x32xf32>
    %6 = vector.shape_cast %5 : vector<1x1x32xf32> to vector<1x32xf32>
    %cst = arith.constant dense<0.000000e+00> : vector<1xf32>
    %7 = vector.multi_reduction <add>, %6, %cst [1] : vector<1x32xf32> to vector<1xf32>
    %8 = vector.shape_cast %7 : vector<1xf32> to vector<1x1xf32>
    %cst_12 = arith.constant 3.200000e+01 : f32
    %9 = vector.broadcast %cst_12 : f32 to vector<1x1xf32>
    %10 = arith.divf %8, %9 : vector<1x1xf32>
    %11 = vector.broadcast %10 : vector<1x1xf32> to vector<1x32xf32>
    %12 = arith.subf %6, %11 : vector<1x32xf32>
    %13 = arith.mulf %12, %12 : vector<1x32xf32>
    %cst_13 = arith.constant dense<0.000000e+00> : vector<1xf32>
    %14 = vector.multi_reduction <add>, %13, %cst_13 [1] : vector<1x32xf32> to vector<1xf32>
    %15 = vector.shape_cast %14 : vector<1xf32> to vector<1x1xf32>
    %cst_14 = arith.constant 3.200000e+01 : f32
    %16 = vector.broadcast %cst_14 : f32 to vector<1x1xf32>
    %17 = arith.divf %15, %16 : vector<1x1xf32>
    %cst_15 = arith.constant 9.99999974E-6 : f32
    %18 = vector.broadcast %cst_15 : f32 to vector<1x1xf32>
    %19 = arith.addf %17, %18 : vector<1x1xf32>
    %20 = math.rsqrt %19 : vector<1x1xf32>
    %21 = vector.broadcast %20 : vector<1x1xf32> to vector<1x32xf32>
    %22 = arith.mulf %12, %21 : vector<1x32xf32>
    %23 = arith.mulf %22, %0 : vector<1x32xf32>
    %24 = arith.addf %23, %1 : vector<1x32xf32>
    %cst_16 = arith.constant dense<0.000000e+00> : vector<1x32xf32>
    %25 = tpu.matmul %24, %3, %cst_16 {dimension_numbers = #tpu.dot_dimension_numbers<[1], [0], [0], [1], [0, 0, 1, 1], [], []>} : vector<1x32xf32>, vector<32x32xf32>, vector<1x32xf32> -> vector<1x32xf32>
    %cst_17 = arith.constant dense<0.000000e+00> : vector<1x32xf32>
    %26 = tpu.matmul %24, %4, %cst_17 {dimension_numbers = #tpu.dot_dimension_numbers<[1], [0], [0], [1], [0, 0, 1, 1], [], []>} : vector<1x32xf32>, vector<32x32xf32>, vector<1x32xf32> -> vector<1x32xf32>
    %c0_18 = arith.constant 0 : index
    %c1 = arith.constant 1 : index
    %c0_19 = arith.constant 0 : index
    %27 = vector.load %arg1[%c0_18, %c1, %c0_19] : memref<8x18x32xf32, #tpu.memory_space<vmem>>, vector<1x16x32xf32>
    %28 = vector.shape_cast %27 : vector<1x16x32xf32> to vector<16x32xf32>
    %cst_20 = arith.constant dense<0.000000e+00> : vector<16xf32>
    %29 = vector.multi_reduction <add>, %28, %cst_20 [1] : vector<16x32xf32> to vector<16xf32>
    %30 = vector.shape_cast %29 : vector<16xf32> to vector<16x1xf32>
    %cst_21 = arith.constant 3.200000e+01 : f32
    %31 = vector.broadcast %cst_21 : f32 to vector<16x1xf32>
    %32 = arith.divf %30, %31 : vector<16x1xf32>
    %33 = vector.broadcast %32 : vector<16x1xf32> to vector<16x32xf32>
    %34 = arith.subf %28, %33 : vector<16x32xf32>
    %35 = arith.mulf %34, %34 : vector<16x32xf32>
    %cst_22 = arith.constant dense<0.000000e+00> : vector<16xf32>
    %36 = vector.multi_reduction <add>, %35, %cst_22 [1] : vector<16x32xf32> to vector<16xf32>
    %37 = vector.shape_cast %36 : vector<16xf32> to vector<16x1xf32>
    %cst_23 = arith.constant 3.200000e+01 : f32
    %38 = vector.broadcast %cst_23 : f32 to vector<16x1xf32>
    %39 = arith.divf %37, %38 : vector<16x1xf32>
    %cst_24 = arith.constant 9.99999974E-6 : f32
    %40 = vector.broadcast %cst_24 : f32 to vector<16x1xf32>
    %41 = arith.addf %39, %40 : vector<16x1xf32>
    %42 = math.rsqrt %41 : vector<16x1xf32>
    %43 = vector.broadcast %42 : vector<16x1xf32> to vector<16x32xf32>
    %44 = arith.mulf %34, %43 : vector<16x32xf32>
    %45 = vector.broadcast %0 : vector<1x32xf32> to vector<16x32xf32>
    %46 = arith.mulf %44, %45 : vector<16x32xf32>
    %47 = vector.broadcast %1 : vector<1x32xf32> to vector<16x32xf32>
    %48 = arith.addf %46, %47 : vector<16x32xf32>
    %49 = vector.broadcast %25 : vector<1x32xf32> to vector<16x32xf32>
    %50 = arith.mulf %48, %49 : vector<16x32xf32>
    %cst_25 = arith.constant dense<0.000000e+00> : vector<16xf32>
    %51 = vector.multi_reduction <add>, %50, %cst_25 [1] : vector<16x32xf32> to vector<16xf32>
    %52 = vector.shape_cast %51 : vector<16xf32> to vector<16x1xf32>
    %53 = arith.negf %52 : vector<16x1xf32>
    %54 = math.exp %53 : vector<16x1xf32>
    %cst_26 = arith.constant 1.000000e+00 : f32
    %55 = vector.broadcast %cst_26 : f32 to vector<16x1xf32>
    %56 = arith.addf %55, %54 : vector<16x1xf32>
    %57 = arith.divf %55, %56 : vector<16x1xf32>
    %c0_27 = arith.constant 0 : index
    %c1_28 = arith.constant 1 : index
    %c0_29 = arith.constant 0 : index
    %58 = vector.load %arg1[%c0_27, %c1_28, %c0_29] : memref<8x18x32xf32, #tpu.memory_space<vmem>>, vector<1x16x32xf32>
    %59 = vector.shape_cast %58 : vector<1x16x32xf32> to vector<16x32xf32>
    %60 = vector.broadcast %57 : vector<16x1xf32> to vector<16x32xf32>
    %61 = vector.broadcast %26 : vector<1x32xf32> to vector<16x32xf32>
    %62 = arith.mulf %60, %61 : vector<16x32xf32>
    %63 = vector.broadcast %2 : vector<1x32xf32> to vector<16x32xf32>
    %64 = arith.addf %62, %63 : vector<16x32xf32>
    %65 = arith.addf %64, %59 : vector<16x32xf32>
    %c0_30 = arith.constant 0 : index
    %c0_31 = arith.constant 0 : index
    %c0_32 = arith.constant 0 : index
    %66 = vector.load %arg7[%c0_30, %c0_31, %c0_32] : memref<8x16x32xf32, #tpu.memory_space<vmem>>, vector<1x16x32xf32>
    %67 = vector.shape_cast %66 : vector<1x16x32xf32> to vector<16x32xf32>
    %68 = vector.shape_cast %65 : vector<16x32xf32> to vector<1x16x32xf32>
    tpu.vector_store %arg7[%c0_30, %c0_31, %c0_32], %68 {strides = array<i32>} : memref<8x16x32xf32, #tpu.memory_space<vmem>>, vector<1x16x32xf32>,
    %c1_33 = arith.constant 1 : index
    %c0_34 = arith.constant 0 : index
    %c0_35 = arith.constant 0 : index
    %69 = vector.load %arg1[%c1_33, %c0_34, %c0_35] : memref<8x18x32xf32, #tpu.memory_space<vmem>>, vector<1x1x32xf32>
    %70 = vector.shape_cast %69 : vector<1x1x32xf32> to vector<1x32xf32>
    %cst_36 = arith.constant dense<0.000000e+00> : vector<1xf32>
    %71 = vector.multi_reduction <add>, %70, %cst_36 [1] : vector<1x32xf32> to vector<1xf32>
    %72 = vector.shape_cast %71 : vector<1xf32> to vector<1x1xf32>
    %cst_37 = arith.constant 3.200000e+01 : f32
    %73 = vector.broadcast %cst_37 : f32 to vector<1x1xf32>
    %74 = arith.divf %72, %73 : vector<1x1xf32>
    %75 = vector.broadcast %74 : vector<1x1xf32> to vector<1x32xf32>
    %76 = arith.subf %70, %75 : vector<1x32xf32>
    %77 = arith.mulf %76, %76 : vector<1x32xf32>
    %cst_38 = arith.constant dense<0.000000e+00> : vector<1xf32>
    %78 = vector.multi_reduction <add>, %77, %cst_38 [1] : vector<1x32xf32> to vector<1xf32>
    %79 = vector.shape_cast %78 : vector<1xf32> to vector<1x1xf32>
    %cst_39 = arith.constant 3.200000e+01 : f32
    %80 = vector.broadcast %cst_39 : f32 to vector<1x1xf32>
    %81 = arith.divf %79, %80 : vector<1x1xf32>
    %cst_40 = arith.constant 9.99999974E-6 : f32
    %82 = vector.broadcast %cst_40 : f32 to vector<1x1xf32>
    %83 = arith.addf %81, %82 : vector<1x1xf32>
    %84 = math.rsqrt %83 : vector<1x1xf32>
    %85 = vector.broadcast %84 : vector<1x1xf32> to vector<1x32xf32>
    %86 = arith.mulf %76, %85 : vector<1x32xf32>
    %87 = arith.mulf %86, %0 : vector<1x32xf32>
    %88 = arith.addf %87, %1 : vector<1x32xf32>
    %cst_41 = arith.constant dense<0.000000e+00> : vector<1x32xf32>
    %89 = tpu.matmul %88, %3, %cst_41 {dimension_numbers = #tpu.dot_dimension_numbers<[1], [0], [0], [1], [0, 0, 1, 1], [], []>} : vector<1x32xf32>, vector<32x32xf32>, vector<1x32xf32> -> vector<1x32xf32>
    %cst_42 = arith.constant dense<0.000000e+00> : vector<1x32xf32>
    %90 = tpu.matmul %88, %4, %cst_42 {dimension_numbers = #tpu.dot_dimension_numbers<[1], [0], [0], [1], [0, 0, 1, 1], [], []>} : vector<1x32xf32>, vector<32x32xf32>, vector<1x32xf32> -> vector<1x32xf32>
    %c1_43 = arith.constant 1 : index
    %c1_44 = arith.constant 1 : index
    %c0_45 = arith.constant 0 : index
    %91 = vector.load %arg1[%c1_43, %c1_44, %c0_45] : memref<8x18x32xf32, #tpu.memory_space<vmem>>, vector<1x16x32xf32>
    %92 = vector.shape_cast %91 : vector<1x16x32xf32> to vector<16x32xf32>
    %cst_46 = arith.constant dense<0.000000e+00> : vector<16xf32>
    %93 = vector.multi_reduction <add>, %92, %cst_46 [1] : vector<16x32xf32> to vector<16xf32>
    %94 = vector.shape_cast %93 : vector<16xf32> to vector<16x1xf32>
    %cst_47 = arith.constant 3.200000e+01 : f32
    %95 = vector.broadcast %cst_47 : f32 to vector<16x1xf32>
    %96 = arith.divf %94, %95 : vector<16x1xf32>
    %97 = vector.broadcast %96 : vector<16x1xf32> to vector<16x32xf32>
    %98 = arith.subf %92, %97 : vector<16x32xf32>
    %99 = arith.mulf %98, %98 : vector<16x32xf32>
    %cst_48 = arith.constant dense<0.000000e+00> : vector<16xf32>
    %100 = vector.multi_reduction <add>, %99, %cst_48 [1] : vector<16x32xf32> to vector<16xf32>
    %101 = vector.shape_cast %100 : vector<16xf32> to vector<16x1xf32>
    %cst_49 = arith.constant 3.200000e+01 : f32
    %102 = vector.broadcast %cst_49 : f32 to vector<16x1xf32>
    %103 = arith.divf %101, %102 : vector<16x1xf32>
    %cst_50 = arith.constant 9.99999974E-6 : f32
    %104 = vector.broadcast %cst_50 : f32 to vector<16x1xf32>
    %105 = arith.addf %103, %104 : vector<16x1xf32>
    %106 = math.rsqrt %105 : vector<16x1xf32>
    %107 = vector.broadcast %106 : vector<16x1xf32> to vector<16x32xf32>
    %108 = arith.mulf %98, %107 : vector<16x32xf32>
    %109 = vector.broadcast %0 : vector<1x32xf32> to vector<16x32xf32>
    %110 = arith.mulf %108, %109 : vector<16x32xf32>
    %111 = vector.broadcast %1 : vector<1x32xf32> to vector<16x32xf32>
    %112 = arith.addf %110, %111 : vector<16x32xf32>
    %113 = vector.broadcast %89 : vector<1x32xf32> to vector<16x32xf32>
    %114 = arith.mulf %112, %113 : vector<16x32xf32>
    %cst_51 = arith.constant dense<0.000000e+00> : vector<16xf32>
    %115 = vector.multi_reduction <add>, %114, %cst_51 [1] : vector<16x32xf32> to vector<16xf32>
    %116 = vector.shape_cast %115 : vector<16xf32> to vector<16x1xf32>
    %117 = arith.negf %116 : vector<16x1xf32>
    %118 = math.exp %117 : vector<16x1xf32>
    %cst_52 = arith.constant 1.000000e+00 : f32
    %119 = vector.broadcast %cst_52 : f32 to vector<16x1xf32>
    %120 = arith.addf %119, %118 : vector<16x1xf32>
    %121 = arith.divf %119, %120 : vector<16x1xf32>
    %c1_53 = arith.constant 1 : index
    %c1_54 = arith.constant 1 : index
    %c0_55 = arith.constant 0 : index
    %122 = vector.load %arg1[%c1_53, %c1_54, %c0_55] : memref<8x18x32xf32, #tpu.memory_space<vmem>>, vector<1x16x32xf32>
    %123 = vector.shape_cast %122 : vector<1x16x32xf32> to vector<16x32xf32>
    %124 = vector.broadcast %121 : vector<16x1xf32> to vector<16x32xf32>
    %125 = vector.broadcast %90 : vector<1x32xf32> to vector<16x32xf32>
    %126 = arith.mulf %124, %125 : vector<16x32xf32>
    %127 = vector.broadcast %2 : vector<1x32xf32> to vector<16x32xf32>
    %128 = arith.addf %126, %127 : vector<16x32xf32>
    %129 = arith.addf %128, %123 : vector<16x32xf32>
    %c1_56 = arith.constant 1 : index
    %c0_57 = arith.constant 0 : index
    %c0_58 = arith.constant 0 : index
    %130 = vector.load %arg7[%c1_56, %c0_57, %c0_58] : memref<8x16x32xf32, #tpu.memory_space<vmem>>, vector<1x16x32xf32>
    %131 = vector.shape_cast %130 : vector<1x16x32xf32> to vector<16x32xf32>
    %132 = vector.shape_cast %129 : vector<16x32xf32> to vector<1x16x32xf32>
    tpu.vector_store %arg7[%c1_56, %c0_57, %c0_58], %132 {strides = array<i32>} : memref<8x16x32xf32, #tpu.memory_space<vmem>>, vector<1x16x32xf32>,
    %c2 = arith.constant 2 : index
    %c0_59 = arith.constant 0 : index
    %c0_60 = arith.constant 0 : index
    %133 = vector.load %arg1[%c2, %c0_59, %c0_60] : memref<8x18x32xf32, #tpu.memory_space<vmem>>, vector<1x1x32xf32>
    %134 = vector.shape_cast %133 : vector<1x1x32xf32> to vector<1x32xf32>
    %cst_61 = arith.constant dense<0.000000e+00> : vector<1xf32>
    %135 = vector.multi_reduction <add>, %134, %cst_61 [1] : vector<1x32xf32> to vector<1xf32>
    %136 = vector.shape_cast %135 : vector<1xf32> to vector<1x1xf32>
    %cst_62 = arith.constant 3.200000e+01 : f32
    %137 = vector.broadcast %cst_62 : f32 to vector<1x1xf32>
    %138 = arith.divf %136, %137 : vector<1x1xf32>
    %139 = vector.broadcast %138 : vector<1x1xf32> to vector<1x32xf32>
    %140 = arith.subf %134, %139 : vector<1x32xf32>
    %141 = arith.mulf %140, %140 : vector<1x32xf32>
    %cst_63 = arith.constant dense<0.000000e+00> : vector<1xf32>
    %142 = vector.multi_reduction <add>, %141, %cst_63 [1] : vector<1x32xf32> to vector<1xf32>
    %143 = vector.shape_cast %142 : vector<1xf32> to vector<1x1xf32>
    %cst_64 = arith.constant 3.200000e+01 : f32
    %144 = vector.broadcast %cst_64 : f32 to vector<1x1xf32>
    %145 = arith.divf %143, %144 : vector<1x1xf32>
    %cst_65 = arith.constant 9.99999974E-6 : f32
    %146 = vector.broadcast %cst_65 : f32 to vector<1x1xf32>
    %147 = arith.addf %145, %146 : vector<1x1xf32>
    %148 = math.rsqrt %147 : vector<1x1xf32>
    %149 = vector.broadcast %148 : vector<1x1xf32> to vector<1x32xf32>
    %150 = arith.mulf %140, %149 : vector<1x32xf32>
    %151 = arith.mulf %150, %0 : vector<1x32xf32>
    %152 = arith.addf %151, %1 : vector<1x32xf32>
    %cst_66 = arith.constant dense<0.000000e+00> : vector<1x32xf32>
    %153 = tpu.matmul %152, %3, %cst_66 {dimension_numbers = #tpu.dot_dimension_numbers<[1], [0], [0], [1], [0, 0, 1, 1], [], []>} : vector<1x32xf32>, vector<32x32xf32>, vector<1x32xf32> -> vector<1x32xf32>
    %cst_67 = arith.constant dense<0.000000e+00> : vector<1x32xf32>
    %154 = tpu.matmul %152, %4, %cst_67 {dimension_numbers = #tpu.dot_dimension_numbers<[1], [0], [0], [1], [0, 0, 1, 1], [], []>} : vector<1x32xf32>, vector<32x32xf32>, vector<1x32xf32> -> vector<1x32xf32>
    %c2_68 = arith.constant 2 : index
    %c1_69 = arith.constant 1 : index
    %c0_70 = arith.constant 0 : index
    %155 = vector.load %arg1[%c2_68, %c1_69, %c0_70] : memref<8x18x32xf32, #tpu.memory_space<vmem>>, vector<1x16x32xf32>
    %156 = vector.shape_cast %155 : vector<1x16x32xf32> to vector<16x32xf32>
    %cst_71 = arith.constant dense<0.000000e+00> : vector<16xf32>
    %157 = vector.multi_reduction <add>, %156, %cst_71 [1] : vector<16x32xf32> to vector<16xf32>
    %158 = vector.shape_cast %157 : vector<16xf32> to vector<16x1xf32>
    %cst_72 = arith.constant 3.200000e+01 : f32
    %159 = vector.broadcast %cst_72 : f32 to vector<16x1xf32>
    %160 = arith.divf %158, %159 : vector<16x1xf32>
    %161 = vector.broadcast %160 : vector<16x1xf32> to vector<16x32xf32>
    %162 = arith.subf %156, %161 : vector<16x32xf32>
    %163 = arith.mulf %162, %162 : vector<16x32xf32>
    %cst_73 = arith.constant dense<0.000000e+00> : vector<16xf32>
    %164 = vector.multi_reduction <add>, %163, %cst_73 [1] : vector<16x32xf32> to vector<16xf32>
    %165 = vector.shape_cast %164 : vector<16xf32> to vector<16x1xf32>
    %cst_74 = arith.constant 3.200000e+01 : f32
    %166 = vector.broadcast %cst_74 : f32 to vector<16x1xf32>
    %167 = arith.divf %165, %166 : vector<16x1xf32>
    %cst_75 = arith.constant 9.99999974E-6 : f32
    %168 = vector.broadcast %cst_75 : f32 to vector<16x1xf32>
    %169 = arith.addf %167, %168 : vector<16x1xf32>
    %170 = math.rsqrt %169 : vector<16x1xf32>
    %171 = vector.broadcast %170 : vector<16x1xf32> to vector<16x32xf32>
    %172 = arith.mulf %162, %171 : vector<16x32xf32>
    %173 = vector.broadcast %0 : vector<1x32xf32> to vector<16x32xf32>
    %174 = arith.mulf %172, %173 : vector<16x32xf32>
    %175 = vector.broadcast %1 : vector<1x32xf32> to vector<16x32xf32>
    %176 = arith.addf %174, %175 : vector<16x32xf32>
    %177 = vector.broadcast %153 : vector<1x32xf32> to vector<16x32xf32>
    %178 = arith.mulf %176, %177 : vector<16x32xf32>
    %cst_76 = arith.constant dense<0.000000e+00> : vector<16xf32>
    %179 = vector.multi_reduction <add>, %178, %cst_76 [1] : vector<16x32xf32> to vector<16xf32>
    %180 = vector.shape_cast %179 : vector<16xf32> to vector<16x1xf32>
    %181 = arith.negf %180 : vector<16x1xf32>
    %182 = math.exp %181 : vector<16x1xf32>
    %cst_77 = arith.constant 1.000000e+00 : f32
    %183 = vector.broadcast %cst_77 : f32 to vector<16x1xf32>
    %184 = arith.addf %183, %182 : vector<16x1xf32>
    %185 = arith.divf %183, %184 : vector<16x1xf32>
    %c2_78 = arith.constant 2 : index
    %c1_79 = arith.constant 1 : index
    %c0_80 = arith.constant 0 : index
    %186 = vector.load %arg1[%c2_78, %c1_79, %c0_80] : memref<8x18x32xf32, #tpu.memory_space<vmem>>, vector<1x16x32xf32>
    %187 = vector.shape_cast %186 : vector<1x16x32xf32> to vector<16x32xf32>
    %188 = vector.broadcast %185 : vector<16x1xf32> to vector<16x32xf32>
    %189 = vector.broadcast %154 : vector<1x32xf32> to vector<16x32xf32>
    %190 = arith.mulf %188, %189 : vector<16x32xf32>
    %191 = vector.broadcast %2 : vector<1x32xf32> to vector<16x32xf32>
    %192 = arith.addf %190, %191 : vector<16x32xf32>
    %193 = arith.addf %192, %187 : vector<16x32xf32>
    %c2_81 = arith.constant 2 : index
    %c0_82 = arith.constant 0 : index
    %c0_83 = arith.constant 0 : index
    %194 = vector.load %arg7[%c2_81, %c0_82, %c0_83] : memref<8x16x32xf32, #tpu.memory_space<vmem>>, vector<1x16x32xf32>
    %195 = vector.shape_cast %194 : vector<1x16x32xf32> to vector<16x32xf32>
    %196 = vector.shape_cast %193 : vector<16x32xf32> to vector<1x16x32xf32>
    tpu.vector_store %arg7[%c2_81, %c0_82, %c0_83], %196 {strides = array<i32>} : memref<8x16x32xf32, #tpu.memory_space<vmem>>, vector<1x16x32xf32>,
    %c3 = arith.constant 3 : index
    %c0_84 = arith.constant 0 : index
    %c0_85 = arith.constant 0 : index
    %197 = vector.load %arg1[%c3, %c0_84, %c0_85] : memref<8x18x32xf32, #tpu.memory_space<vmem>>, vector<1x1x32xf32>
    %198 = vector.shape_cast %197 : vector<1x1x32xf32> to vector<1x32xf32>
    %cst_86 = arith.constant dense<0.000000e+00> : vector<1xf32>
    %199 = vector.multi_reduction <add>, %198, %cst_86 [1] : vector<1x32xf32> to vector<1xf32>
    %200 = vector.shape_cast %199 : vector<1xf32> to vector<1x1xf32>
    %cst_87 = arith.constant 3.200000e+01 : f32
    %201 = vector.broadcast %cst_87 : f32 to vector<1x1xf32>
    %202 = arith.divf %200, %201 : vector<1x1xf32>
    %203 = vector.broadcast %202 : vector<1x1xf32> to vector<1x32xf32>
    %204 = arith.subf %198, %203 : vector<1x32xf32>
    %205 = arith.mulf %204, %204 : vector<1x32xf32>
    %cst_88 = arith.constant dense<0.000000e+00> : vector<1xf32>
    %206 = vector.multi_reduction <add>, %205, %cst_88 [1] : vector<1x32xf32> to vector<1xf32>
    %207 = vector.shape_cast %206 : vector<1xf32> to vector<1x1xf32>
    %cst_89 = arith.constant 3.200000e+01 : f32
    %208 = vector.broadcast %cst_89 : f32 to vector<1x1xf32>
    %209 = arith.divf %207, %208 : vector<1x1xf32>
    %cst_90 = arith.constant 9.99999974E-6 : f32
    %210 = vector.broadcast %cst_90 : f32 to vector<1x1xf32>
    %211 = arith.addf %209, %210 : vector<1x1xf32>
    %212 = math.rsqrt %211 : vector<1x1xf32>
    %213 = vector.broadcast %212 : vector<1x1xf32> to vector<1x32xf32>
    %214 = arith.mulf %204, %213 : vector<1x32xf32>
    %215 = arith.mulf %214, %0 : vector<1x32xf32>
    %216 = arith.addf %215, %1 : vector<1x32xf32>
    %cst_91 = arith.constant dense<0.000000e+00> : vector<1x32xf32>
    %217 = tpu.matmul %216, %3, %cst_91 {dimension_numbers = #tpu.dot_dimension_numbers<[1], [0], [0], [1], [0, 0, 1, 1], [], []>} : vector<1x32xf32>, vector<32x32xf32>, vector<1x32xf32> -> vector<1x32xf32>
    %cst_92 = arith.constant dense<0.000000e+00> : vector<1x32xf32>
    %218 = tpu.matmul %216, %4, %cst_92 {dimension_numbers = #tpu.dot_dimension_numbers<[1], [0], [0], [1], [0, 0, 1, 1], [], []>} : vector<1x32xf32>, vector<32x32xf32>, vector<1x32xf32> -> vector<1x32xf32>
    %c3_93 = arith.constant 3 : index
    %c1_94 = arith.constant 1 : index
    %c0_95 = arith.constant 0 : index
    %219 = vector.load %arg1[%c3_93, %c1_94, %c0_95] : memref<8x18x32xf32, #tpu.memory_space<vmem>>, vector<1x16x32xf32>
    %220 = vector.shape_cast %219 : vector<1x16x32xf32> to vector<16x32xf32>
    %cst_96 = arith.constant dense<0.000000e+00> : vector<16xf32>
    %221 = vector.multi_reduction <add>, %220, %cst_96 [1] : vector<16x32xf32> to vector<16xf32>
    %222 = vector.shape_cast %221 : vector<16xf32> to vector<16x1xf32>
    %cst_97 = arith.constant 3.200000e+01 : f32
    %223 = vector.broadcast %cst_97 : f32 to vector<16x1xf32>
    %224 = arith.divf %222, %223 : vector<16x1xf32>
    %225 = vector.broadcast %224 : vector<16x1xf32> to vector<16x32xf32>
    %226 = arith.subf %220, %225 : vector<16x32xf32>
    %227 = arith.mulf %226, %226 : vector<16x32xf32>
    %cst_98 = arith.constant dense<0.000000e+00> : vector<16xf32>
    %228 = vector.multi_reduction <add>, %227, %cst_98 [1] : vector<16x32xf32> to vector<16xf32>
    %229 = vector.shape_cast %228 : vector<16xf32> to vector<16x1xf32>
    %cst_99 = arith.constant 3.200000e+01 : f32
    %230 = vector.broadcast %cst_99 : f32 to vector<16x1xf32>
    %231 = arith.divf %229, %230 : vector<16x1xf32>
    %cst_100 = arith.constant 9.99999974E-6 : f32
    %232 = vector.broadcast %cst_100 : f32 to vector<16x1xf32>
    %233 = arith.addf %231, %232 : vector<16x1xf32>
    %234 = math.rsqrt %233 : vector<16x1xf32>
    %235 = vector.broadcast %234 : vector<16x1xf32> to vector<16x32xf32>
    %236 = arith.mulf %226, %235 : vector<16x32xf32>
    %237 = vector.broadcast %0 : vector<1x32xf32> to vector<16x32xf32>
    %238 = arith.mulf %236, %237 : vector<16x32xf32>
    %239 = vector.broadcast %1 : vector<1x32xf32> to vector<16x32xf32>
    %240 = arith.addf %238, %239 : vector<16x32xf32>
    %241 = vector.broadcast %217 : vector<1x32xf32> to vector<16x32xf32>
    %242 = arith.mulf %240, %241 : vector<16x32xf32>
    %cst_101 = arith.constant dense<0.000000e+00> : vector<16xf32>
    %243 = vector.multi_reduction <add>, %242, %cst_101 [1] : vector<16x32xf32> to vector<16xf32>
    %244 = vector.shape_cast %243 : vector<16xf32> to vector<16x1xf32>
    %245 = arith.negf %244 : vector<16x1xf32>
    %246 = math.exp %245 : vector<16x1xf32>
    %cst_102 = arith.constant 1.000000e+00 : f32
    %247 = vector.broadcast %cst_102 : f32 to vector<16x1xf32>
    %248 = arith.addf %247, %246 : vector<16x1xf32>
    %249 = arith.divf %247, %248 : vector<16x1xf32>
    %c3_103 = arith.constant 3 : index
    %c1_104 = arith.constant 1 : index
    %c0_105 = arith.constant 0 : index
    %250 = vector.load %arg1[%c3_103, %c1_104, %c0_105] : memref<8x18x32xf32, #tpu.memory_space<vmem>>, vector<1x16x32xf32>
    %251 = vector.shape_cast %250 : vector<1x16x32xf32> to vector<16x32xf32>
    %252 = vector.broadcast %249 : vector<16x1xf32> to vector<16x32xf32>
    %253 = vector.broadcast %218 : vector<1x32xf32> to vector<16x32xf32>
    %254 = arith.mulf %252, %253 : vector<16x32xf32>
    %255 = vector.broadcast %2 : vector<1x32xf32> to vector<16x32xf32>
    %256 = arith.addf %254, %255 : vector<16x32xf32>
    %257 = arith.addf %256, %251 : vector<16x32xf32>
    %c3_106 = arith.constant 3 : index
    %c0_107 = arith.constant 0 : index
    %c0_108 = arith.constant 0 : index
    %258 = vector.load %arg7[%c3_106, %c0_107, %c0_108] : memref<8x16x32xf32, #tpu.memory_space<vmem>>, vector<1x16x32xf32>
    %259 = vector.shape_cast %258 : vector<1x16x32xf32> to vector<16x32xf32>
    %260 = vector.shape_cast %257 : vector<16x32xf32> to vector<1x16x32xf32>
    tpu.vector_store %arg7[%c3_106, %c0_107, %c0_108], %260 {strides = array<i32>} : memref<8x16x32xf32, #tpu.memory_space<vmem>>, vector<1x16x32xf32>,
    %c4 = arith.constant 4 : index
    %c0_109 = arith.constant 0 : index
    %c0_110 = arith.constant 0 : index
    %261 = vector.load %arg1[%c4, %c0_109, %c0_110] : memref<8x18x32xf32, #tpu.memory_space<vmem>>, vector<1x1x32xf32>
    %262 = vector.shape_cast %261 : vector<1x1x32xf32> to vector<1x32xf32>
    %cst_111 = arith.constant dense<0.000000e+00> : vector<1xf32>
    %263 = vector.multi_reduction <add>, %262, %cst_111 [1] : vector<1x32xf32> to vector<1xf32>
    %264 = vector.shape_cast %263 : vector<1xf32> to vector<1x1xf32>
    %cst_112 = arith.constant 3.200000e+01 : f32
    %265 = vector.broadcast %cst_112 : f32 to vector<1x1xf32>
    %266 = arith.divf %264, %265 : vector<1x1xf32>
    %267 = vector.broadcast %266 : vector<1x1xf32> to vector<1x32xf32>
    %268 = arith.subf %262, %267 : vector<1x32xf32>
    %269 = arith.mulf %268, %268 : vector<1x32xf32>
    %cst_113 = arith.constant dense<0.000000e+00> : vector<1xf32>
    %270 = vector.multi_reduction <add>, %269, %cst_113 [1] : vector<1x32xf32> to vector<1xf32>
    %271 = vector.shape_cast %270 : vector<1xf32> to vector<1x1xf32>
    %cst_114 = arith.constant 3.200000e+01 : f32
    %272 = vector.broadcast %cst_114 : f32 to vector<1x1xf32>
    %273 = arith.divf %271, %272 : vector<1x1xf32>
    %cst_115 = arith.constant 9.99999974E-6 : f32
    %274 = vector.broadcast %cst_115 : f32 to vector<1x1xf32>
    %275 = arith.addf %273, %274 : vector<1x1xf32>
    %276 = math.rsqrt %275 : vector<1x1xf32>
    %277 = vector.broadcast %276 : vector<1x1xf32> to vector<1x32xf32>
    %278 = arith.mulf %268, %277 : vector<1x32xf32>
    %279 = arith.mulf %278, %0 : vector<1x32xf32>
    %280 = arith.addf %279, %1 : vector<1x32xf32>
    %cst_116 = arith.constant dense<0.000000e+00> : vector<1x32xf32>
    %281 = tpu.matmul %280, %3, %cst_116 {dimension_numbers = #tpu.dot_dimension_numbers<[1], [0], [0], [1], [0, 0, 1, 1], [], []>} : vector<1x32xf32>, vector<32x32xf32>, vector<1x32xf32> -> vector<1x32xf32>
    %cst_117 = arith.constant dense<0.000000e+00> : vector<1x32xf32>
    %282 = tpu.matmul %280, %4, %cst_117 {dimension_numbers = #tpu.dot_dimension_numbers<[1], [0], [0], [1], [0, 0, 1, 1], [], []>} : vector<1x32xf32>, vector<32x32xf32>, vector<1x32xf32> -> vector<1x32xf32>
    %c4_118 = arith.constant 4 : index
    %c1_119 = arith.constant 1 : index
    %c0_120 = arith.constant 0 : index
    %283 = vector.load %arg1[%c4_118, %c1_119, %c0_120] : memref<8x18x32xf32, #tpu.memory_space<vmem>>, vector<1x16x32xf32>
    %284 = vector.shape_cast %283 : vector<1x16x32xf32> to vector<16x32xf32>
    %cst_121 = arith.constant dense<0.000000e+00> : vector<16xf32>
    %285 = vector.multi_reduction <add>, %284, %cst_121 [1] : vector<16x32xf32> to vector<16xf32>
    %286 = vector.shape_cast %285 : vector<16xf32> to vector<16x1xf32>
    %cst_122 = arith.constant 3.200000e+01 : f32
    %287 = vector.broadcast %cst_122 : f32 to vector<16x1xf32>
    %288 = arith.divf %286, %287 : vector<16x1xf32>
    %289 = vector.broadcast %288 : vector<16x1xf32> to vector<16x32xf32>
    %290 = arith.subf %284, %289 : vector<16x32xf32>
    %291 = arith.mulf %290, %290 : vector<16x32xf32>
    %cst_123 = arith.constant dense<0.000000e+00> : vector<16xf32>
    %292 = vector.multi_reduction <add>, %291, %cst_123 [1] : vector<16x32xf32> to vector<16xf32>
    %293 = vector.shape_cast %292 : vector<16xf32> to vector<16x1xf32>
    %cst_124 = arith.constant 3.200000e+01 : f32
    %294 = vector.broadcast %cst_124 : f32 to vector<16x1xf32>
    %295 = arith.divf %293, %294 : vector<16x1xf32>
    %cst_125 = arith.constant 9.99999974E-6 : f32
    %296 = vector.broadcast %cst_125 : f32 to vector<16x1xf32>
    %297 = arith.addf %295, %296 : vector<16x1xf32>
    %298 = math.rsqrt %297 : vector<16x1xf32>
    %299 = vector.broadcast %298 : vector<16x1xf32> to vector<16x32xf32>
    %300 = arith.mulf %290, %299 : vector<16x32xf32>
    %301 = vector.broadcast %0 : vector<1x32xf32> to vector<16x32xf32>
    %302 = arith.mulf %300, %301 : vector<16x32xf32>
    %303 = vector.broadcast %1 : vector<1x32xf32> to vector<16x32xf32>
    %304 = arith.addf %302, %303 : vector<16x32xf32>
    %305 = vector.broadcast %281 : vector<1x32xf32> to vector<16x32xf32>
    %306 = arith.mulf %304, %305 : vector<16x32xf32>
    %cst_126 = arith.constant dense<0.000000e+00> : vector<16xf32>
    %307 = vector.multi_reduction <add>, %306, %cst_126 [1] : vector<16x32xf32> to vector<16xf32>
    %308 = vector.shape_cast %307 : vector<16xf32> to vector<16x1xf32>
    %309 = arith.negf %308 : vector<16x1xf32>
    %310 = math.exp %309 : vector<16x1xf32>
    %cst_127 = arith.constant 1.000000e+00 : f32
    %311 = vector.broadcast %cst_127 : f32 to vector<16x1xf32>
    %312 = arith.addf %311, %310 : vector<16x1xf32>
    %313 = arith.divf %311, %312 : vector<16x1xf32>
    %c4_128 = arith.constant 4 : index
    %c1_129 = arith.constant 1 : index
    %c0_130 = arith.constant 0 : index
    %314 = vector.load %arg1[%c4_128, %c1_129, %c0_130] : memref<8x18x32xf32, #tpu.memory_space<vmem>>, vector<1x16x32xf32>
    %315 = vector.shape_cast %314 : vector<1x16x32xf32> to vector<16x32xf32>
    %316 = vector.broadcast %313 : vector<16x1xf32> to vector<16x32xf32>
    %317 = vector.broadcast %282 : vector<1x32xf32> to vector<16x32xf32>
    %318 = arith.mulf %316, %317 : vector<16x32xf32>
    %319 = vector.broadcast %2 : vector<1x32xf32> to vector<16x32xf32>
    %320 = arith.addf %318, %319 : vector<16x32xf32>
    %321 = arith.addf %320, %315 : vector<16x32xf32>
    %c4_131 = arith.constant 4 : index
    %c0_132 = arith.constant 0 : index
    %c0_133 = arith.constant 0 : index
    %322 = vector.load %arg7[%c4_131, %c0_132, %c0_133] : memref<8x16x32xf32, #tpu.memory_space<vmem>>, vector<1x16x32xf32>
    %323 = vector.shape_cast %322 : vector<1x16x32xf32> to vector<16x32xf32>
    %324 = vector.shape_cast %321 : vector<16x32xf32> to vector<1x16x32xf32>
    tpu.vector_store %arg7[%c4_131, %c0_132, %c0_133], %324 {strides = array<i32>} : memref<8x16x32xf32, #tpu.memory_space<vmem>>, vector<1x16x32xf32>,
    %c5 = arith.constant 5 : index
    %c0_134 = arith.constant 0 : index
    %c0_135 = arith.constant 0 : index
    %325 = vector.load %arg1[%c5, %c0_134, %c0_135] : memref<8x18x32xf32, #tpu.memory_space<vmem>>, vector<1x1x32xf32>
    %326 = vector.shape_cast %325 : vector<1x1x32xf32> to vector<1x32xf32>
    %cst_136 = arith.constant dense<0.000000e+00> : vector<1xf32>
    %327 = vector.multi_reduction <add>, %326, %cst_136 [1] : vector<1x32xf32> to vector<1xf32>
    %328 = vector.shape_cast %327 : vector<1xf32> to vector<1x1xf32>
    %cst_137 = arith.constant 3.200000e+01 : f32
    %329 = vector.broadcast %cst_137 : f32 to vector<1x1xf32>
    %330 = arith.divf %328, %329 : vector<1x1xf32>
    %331 = vector.broadcast %330 : vector<1x1xf32> to vector<1x32xf32>
    %332 = arith.subf %326, %331 : vector<1x32xf32>
    %333 = arith.mulf %332, %332 : vector<1x32xf32>
    %cst_138 = arith.constant dense<0.000000e+00> : vector<1xf32>
    %334 = vector.multi_reduction <add>, %333, %cst_138 [1] : vector<1x32xf32> to vector<1xf32>
    %335 = vector.shape_cast %334 : vector<1xf32> to vector<1x1xf32>
    %cst_139 = arith.constant 3.200000e+01 : f32
    %336 = vector.broadcast %cst_139 : f32 to vector<1x1xf32>
    %337 = arith.divf %335, %336 : vector<1x1xf32>
    %cst_140 = arith.constant 9.99999974E-6 : f32
    %338 = vector.broadcast %cst_140 : f32 to vector<1x1xf32>
    %339 = arith.addf %337, %338 : vector<1x1xf32>
    %340 = math.rsqrt %339 : vector<1x1xf32>
    %341 = vector.broadcast %340 : vector<1x1xf32> to vector<1x32xf32>
    %342 = arith.mulf %332, %341 : vector<1x32xf32>
    %343 = arith.mulf %342, %0 : vector<1x32xf32>
    %344 = arith.addf %343, %1 : vector<1x32xf32>
    %cst_141 = arith.constant dense<0.000000e+00> : vector<1x32xf32>
    %345 = tpu.matmul %344, %3, %cst_141 {dimension_numbers = #tpu.dot_dimension_numbers<[1], [0], [0], [1], [0, 0, 1, 1], [], []>} : vector<1x32xf32>, vector<32x32xf32>, vector<1x32xf32> -> vector<1x32xf32>
    %cst_142 = arith.constant dense<0.000000e+00> : vector<1x32xf32>
    %346 = tpu.matmul %344, %4, %cst_142 {dimension_numbers = #tpu.dot_dimension_numbers<[1], [0], [0], [1], [0, 0, 1, 1], [], []>} : vector<1x32xf32>, vector<32x32xf32>, vector<1x32xf32> -> vector<1x32xf32>
    %c5_143 = arith.constant 5 : index
    %c1_144 = arith.constant 1 : index
    %c0_145 = arith.constant 0 : index
    %347 = vector.load %arg1[%c5_143, %c1_144, %c0_145] : memref<8x18x32xf32, #tpu.memory_space<vmem>>, vector<1x16x32xf32>
    %348 = vector.shape_cast %347 : vector<1x16x32xf32> to vector<16x32xf32>
    %cst_146 = arith.constant dense<0.000000e+00> : vector<16xf32>
    %349 = vector.multi_reduction <add>, %348, %cst_146 [1] : vector<16x32xf32> to vector<16xf32>
    %350 = vector.shape_cast %349 : vector<16xf32> to vector<16x1xf32>
    %cst_147 = arith.constant 3.200000e+01 : f32
    %351 = vector.broadcast %cst_147 : f32 to vector<16x1xf32>
    %352 = arith.divf %350, %351 : vector<16x1xf32>
    %353 = vector.broadcast %352 : vector<16x1xf32> to vector<16x32xf32>
    %354 = arith.subf %348, %353 : vector<16x32xf32>
    %355 = arith.mulf %354, %354 : vector<16x32xf32>
    %cst_148 = arith.constant dense<0.000000e+00> : vector<16xf32>
    %356 = vector.multi_reduction <add>, %355, %cst_148 [1] : vector<16x32xf32> to vector<16xf32>
    %357 = vector.shape_cast %356 : vector<16xf32> to vector<16x1xf32>
    %cst_149 = arith.constant 3.200000e+01 : f32
    %358 = vector.broadcast %cst_149 : f32 to vector<16x1xf32>
    %359 = arith.divf %357, %358 : vector<16x1xf32>
    %cst_150 = arith.constant 9.99999974E-6 : f32
    %360 = vector.broadcast %cst_150 : f32 to vector<16x1xf32>
    %361 = arith.addf %359, %360 : vector<16x1xf32>
    %362 = math.rsqrt %361 : vector<16x1xf32>
    %363 = vector.broadcast %362 : vector<16x1xf32> to vector<16x32xf32>
    %364 = arith.mulf %354, %363 : vector<16x32xf32>
    %365 = vector.broadcast %0 : vector<1x32xf32> to vector<16x32xf32>
    %366 = arith.mulf %364, %365 : vector<16x32xf32>
    %367 = vector.broadcast %1 : vector<1x32xf32> to vector<16x32xf32>
    %368 = arith.addf %366, %367 : vector<16x32xf32>
    %369 = vector.broadcast %345 : vector<1x32xf32> to vector<16x32xf32>
    %370 = arith.mulf %368, %369 : vector<16x32xf32>
    %cst_151 = arith.constant dense<0.000000e+00> : vector<16xf32>
    %371 = vector.multi_reduction <add>, %370, %cst_151 [1] : vector<16x32xf32> to vector<16xf32>
    %372 = vector.shape_cast %371 : vector<16xf32> to vector<16x1xf32>
    %373 = arith.negf %372 : vector<16x1xf32>
    %374 = math.exp %373 : vector<16x1xf32>
    %cst_152 = arith.constant 1.000000e+00 : f32
    %375 = vector.broadcast %cst_152 : f32 to vector<16x1xf32>
    %376 = arith.addf %375, %374 : vector<16x1xf32>
    %377 = arith.divf %375, %376 : vector<16x1xf32>
    %c5_153 = arith.constant 5 : index
    %c1_154 = arith.constant 1 : index
    %c0_155 = arith.constant 0 : index
    %378 = vector.load %arg1[%c5_153, %c1_154, %c0_155] : memref<8x18x32xf32, #tpu.memory_space<vmem>>, vector<1x16x32xf32>
    %379 = vector.shape_cast %378 : vector<1x16x32xf32> to vector<16x32xf32>
    %380 = vector.broadcast %377 : vector<16x1xf32> to vector<16x32xf32>
    %381 = vector.broadcast %346 : vector<1x32xf32> to vector<16x32xf32>
    %382 = arith.mulf %380, %381 : vector<16x32xf32>
    %383 = vector.broadcast %2 : vector<1x32xf32> to vector<16x32xf32>
    %384 = arith.addf %382, %383 : vector<16x32xf32>
    %385 = arith.addf %384, %379 : vector<16x32xf32>
    %c5_156 = arith.constant 5 : index
    %c0_157 = arith.constant 0 : index
    %c0_158 = arith.constant 0 : index
    %386 = vector.load %arg7[%c5_156, %c0_157, %c0_158] : memref<8x16x32xf32, #tpu.memory_space<vmem>>, vector<1x16x32xf32>
    %387 = vector.shape_cast %386 : vector<1x16x32xf32> to vector<16x32xf32>
    %388 = vector.shape_cast %385 : vector<16x32xf32> to vector<1x16x32xf32>
    tpu.vector_store %arg7[%c5_156, %c0_157, %c0_158], %388 {strides = array<i32>} : memref<8x16x32xf32, #tpu.memory_space<vmem>>, vector<1x16x32xf32>,
    %c6 = arith.constant 6 : index
    %c0_159 = arith.constant 0 : index
    %c0_160 = arith.constant 0 : index
    %389 = vector.load %arg1[%c6, %c0_159, %c0_160] : memref<8x18x32xf32, #tpu.memory_space<vmem>>, vector<1x1x32xf32>
    %390 = vector.shape_cast %389 : vector<1x1x32xf32> to vector<1x32xf32>
    %cst_161 = arith.constant dense<0.000000e+00> : vector<1xf32>
    %391 = vector.multi_reduction <add>, %390, %cst_161 [1] : vector<1x32xf32> to vector<1xf32>
    %392 = vector.shape_cast %391 : vector<1xf32> to vector<1x1xf32>
    %cst_162 = arith.constant 3.200000e+01 : f32
    %393 = vector.broadcast %cst_162 : f32 to vector<1x1xf32>
    %394 = arith.divf %392, %393 : vector<1x1xf32>
    %395 = vector.broadcast %394 : vector<1x1xf32> to vector<1x32xf32>
    %396 = arith.subf %390, %395 : vector<1x32xf32>
    %397 = arith.mulf %396, %396 : vector<1x32xf32>
    %cst_163 = arith.constant dense<0.000000e+00> : vector<1xf32>
    %398 = vector.multi_reduction <add>, %397, %cst_163 [1] : vector<1x32xf32> to vector<1xf32>
    %399 = vector.shape_cast %398 : vector<1xf32> to vector<1x1xf32>
    %cst_164 = arith.constant 3.200000e+01 : f32
    %400 = vector.broadcast %cst_164 : f32 to vector<1x1xf32>
    %401 = arith.divf %399, %400 : vector<1x1xf32>
    %cst_165 = arith.constant 9.99999974E-6 : f32
    %402 = vector.broadcast %cst_165 : f32 to vector<1x1xf32>
    %403 = arith.addf %401, %402 : vector<1x1xf32>
    %404 = math.rsqrt %403 : vector<1x1xf32>
    %405 = vector.broadcast %404 : vector<1x1xf32> to vector<1x32xf32>
    %406 = arith.mulf %396, %405 : vector<1x32xf32>
    %407 = arith.mulf %406, %0 : vector<1x32xf32>
    %408 = arith.addf %407, %1 : vector<1x32xf32>
    %cst_166 = arith.constant dense<0.000000e+00> : vector<1x32xf32>
    %409 = tpu.matmul %408, %3, %cst_166 {dimension_numbers = #tpu.dot_dimension_numbers<[1], [0], [0], [1], [0, 0, 1, 1], [], []>} : vector<1x32xf32>, vector<32x32xf32>, vector<1x32xf32> -> vector<1x32xf32>
    %cst_167 = arith.constant dense<0.000000e+00> : vector<1x32xf32>
    %410 = tpu.matmul %408, %4, %cst_167 {dimension_numbers = #tpu.dot_dimension_numbers<[1], [0], [0], [1], [0, 0, 1, 1], [], []>} : vector<1x32xf32>, vector<32x32xf32>, vector<1x32xf32> -> vector<1x32xf32>
    %c6_168 = arith.constant 6 : index
    %c1_169 = arith.constant 1 : index
    %c0_170 = arith.constant 0 : index
    %411 = vector.load %arg1[%c6_168, %c1_169, %c0_170] : memref<8x18x32xf32, #tpu.memory_space<vmem>>, vector<1x16x32xf32>
    %412 = vector.shape_cast %411 : vector<1x16x32xf32> to vector<16x32xf32>
    %cst_171 = arith.constant dense<0.000000e+00> : vector<16xf32>
    %413 = vector.multi_reduction <add>, %412, %cst_171 [1] : vector<16x32xf32> to vector<16xf32>
    %414 = vector.shape_cast %413 : vector<16xf32> to vector<16x1xf32>
    %cst_172 = arith.constant 3.200000e+01 : f32
    %415 = vector.broadcast %cst_172 : f32 to vector<16x1xf32>
    %416 = arith.divf %414, %415 : vector<16x1xf32>
    %417 = vector.broadcast %416 : vector<16x1xf32> to vector<16x32xf32>
    %418 = arith.subf %412, %417 : vector<16x32xf32>
    %419 = arith.mulf %418, %418 : vector<16x32xf32>
    %cst_173 = arith.constant dense<0.000000e+00> : vector<16xf32>
    %420 = vector.multi_reduction <add>, %419, %cst_173 [1] : vector<16x32xf32> to vector<16xf32>
    %421 = vector.shape_cast %420 : vector<16xf32> to vector<16x1xf32>
    %cst_174 = arith.constant 3.200000e+01 : f32
    %422 = vector.broadcast %cst_174 : f32 to vector<16x1xf32>
    %423 = arith.divf %421, %422 : vector<16x1xf32>
    %cst_175 = arith.constant 9.99999974E-6 : f32
    %424 = vector.broadcast %cst_175 : f32 to vector<16x1xf32>
    %425 = arith.addf %423, %424 : vector<16x1xf32>
    %426 = math.rsqrt %425 : vector<16x1xf32>
    %427 = vector.broadcast %426 : vector<16x1xf32> to vector<16x32xf32>
    %428 = arith.mulf %418, %427 : vector<16x32xf32>
    %429 = vector.broadcast %0 : vector<1x32xf32> to vector<16x32xf32>
    %430 = arith.mulf %428, %429 : vector<16x32xf32>
    %431 = vector.broadcast %1 : vector<1x32xf32> to vector<16x32xf32>
    %432 = arith.addf %430, %431 : vector<16x32xf32>
    %433 = vector.broadcast %409 : vector<1x32xf32> to vector<16x32xf32>
    %434 = arith.mulf %432, %433 : vector<16x32xf32>
    %cst_176 = arith.constant dense<0.000000e+00> : vector<16xf32>
    %435 = vector.multi_reduction <add>, %434, %cst_176 [1] : vector<16x32xf32> to vector<16xf32>
    %436 = vector.shape_cast %435 : vector<16xf32> to vector<16x1xf32>
    %437 = arith.negf %436 : vector<16x1xf32>
    %438 = math.exp %437 : vector<16x1xf32>
    %cst_177 = arith.constant 1.000000e+00 : f32
    %439 = vector.broadcast %cst_177 : f32 to vector<16x1xf32>
    %440 = arith.addf %439, %438 : vector<16x1xf32>
    %441 = arith.divf %439, %440 : vector<16x1xf32>
    %c6_178 = arith.constant 6 : index
    %c1_179 = arith.constant 1 : index
    %c0_180 = arith.constant 0 : index
    %442 = vector.load %arg1[%c6_178, %c1_179, %c0_180] : memref<8x18x32xf32, #tpu.memory_space<vmem>>, vector<1x16x32xf32>
    %443 = vector.shape_cast %442 : vector<1x16x32xf32> to vector<16x32xf32>
    %444 = vector.broadcast %441 : vector<16x1xf32> to vector<16x32xf32>
    %445 = vector.broadcast %410 : vector<1x32xf32> to vector<16x32xf32>
    %446 = arith.mulf %444, %445 : vector<16x32xf32>
    %447 = vector.broadcast %2 : vector<1x32xf32> to vector<16x32xf32>
    %448 = arith.addf %446, %447 : vector<16x32xf32>
    %449 = arith.addf %448, %443 : vector<16x32xf32>
    %c6_181 = arith.constant 6 : index
    %c0_182 = arith.constant 0 : index
    %c0_183 = arith.constant 0 : index
    %450 = vector.load %arg7[%c6_181, %c0_182, %c0_183] : memref<8x16x32xf32, #tpu.memory_space<vmem>>, vector<1x16x32xf32>
    %451 = vector.shape_cast %450 : vector<1x16x32xf32> to vector<16x32xf32>
    %452 = vector.shape_cast %449 : vector<16x32xf32> to vector<1x16x32xf32>
    tpu.vector_store %arg7[%c6_181, %c0_182, %c0_183], %452 {strides = array<i32>} : memref<8x16x32xf32, #tpu.memory_space<vmem>>, vector<1x16x32xf32>,
    %c7 = arith.constant 7 : index
    %c0_184 = arith.constant 0 : index
    %c0_185 = arith.constant 0 : index
    %453 = vector.load %arg1[%c7, %c0_184, %c0_185] : memref<8x18x32xf32, #tpu.memory_space<vmem>>, vector<1x1x32xf32>
    %454 = vector.shape_cast %453 : vector<1x1x32xf32> to vector<1x32xf32>
    %cst_186 = arith.constant dense<0.000000e+00> : vector<1xf32>
    %455 = vector.multi_reduction <add>, %454, %cst_186 [1] : vector<1x32xf32> to vector<1xf32>
    %456 = vector.shape_cast %455 : vector<1xf32> to vector<1x1xf32>
    %cst_187 = arith.constant 3.200000e+01 : f32
    %457 = vector.broadcast %cst_187 : f32 to vector<1x1xf32>
    %458 = arith.divf %456, %457 : vector<1x1xf32>
    %459 = vector.broadcast %458 : vector<1x1xf32> to vector<1x32xf32>
    %460 = arith.subf %454, %459 : vector<1x32xf32>
    %461 = arith.mulf %460, %460 : vector<1x32xf32>
    %cst_188 = arith.constant dense<0.000000e+00> : vector<1xf32>
    %462 = vector.multi_reduction <add>, %461, %cst_188 [1] : vector<1x32xf32> to vector<1xf32>
    %463 = vector.shape_cast %462 : vector<1xf32> to vector<1x1xf32>
    %cst_189 = arith.constant 3.200000e+01 : f32
    %464 = vector.broadcast %cst_189 : f32 to vector<1x1xf32>
    %465 = arith.divf %463, %464 : vector<1x1xf32>
    %cst_190 = arith.constant 9.99999974E-6 : f32
    %466 = vector.broadcast %cst_190 : f32 to vector<1x1xf32>
    %467 = arith.addf %465, %466 : vector<1x1xf32>
    %468 = math.rsqrt %467 : vector<1x1xf32>
    %469 = vector.broadcast %468 : vector<1x1xf32> to vector<1x32xf32>
    %470 = arith.mulf %460, %469 : vector<1x32xf32>
    %471 = arith.mulf %470, %0 : vector<1x32xf32>
    %472 = arith.addf %471, %1 : vector<1x32xf32>
    %cst_191 = arith.constant dense<0.000000e+00> : vector<1x32xf32>
    %473 = tpu.matmul %472, %3, %cst_191 {dimension_numbers = #tpu.dot_dimension_numbers<[1], [0], [0], [1], [0, 0, 1, 1], [], []>} : vector<1x32xf32>, vector<32x32xf32>, vector<1x32xf32> -> vector<1x32xf32>
    %cst_192 = arith.constant dense<0.000000e+00> : vector<1x32xf32>
    %474 = tpu.matmul %472, %4, %cst_192 {dimension_numbers = #tpu.dot_dimension_numbers<[1], [0], [0], [1], [0, 0, 1, 1], [], []>} : vector<1x32xf32>, vector<32x32xf32>, vector<1x32xf32> -> vector<1x32xf32>
    %c7_193 = arith.constant 7 : index
    %c1_194 = arith.constant 1 : index
    %c0_195 = arith.constant 0 : index
    %475 = vector.load %arg1[%c7_193, %c1_194, %c0_195] : memref<8x18x32xf32, #tpu.memory_space<vmem>>, vector<1x16x32xf32>
    %476 = vector.shape_cast %475 : vector<1x16x32xf32> to vector<16x32xf32>
    %cst_196 = arith.constant dense<0.000000e+00> : vector<16xf32>
    %477 = vector.multi_reduction <add>, %476, %cst_196 [1] : vector<16x32xf32> to vector<16xf32>
    %478 = vector.shape_cast %477 : vector<16xf32> to vector<16x1xf32>
    %cst_197 = arith.constant 3.200000e+01 : f32
    %479 = vector.broadcast %cst_197 : f32 to vector<16x1xf32>
    %480 = arith.divf %478, %479 : vector<16x1xf32>
    %481 = vector.broadcast %480 : vector<16x1xf32> to vector<16x32xf32>
    %482 = arith.subf %476, %481 : vector<16x32xf32>
    %483 = arith.mulf %482, %482 : vector<16x32xf32>
    %cst_198 = arith.constant dense<0.000000e+00> : vector<16xf32>
    %484 = vector.multi_reduction <add>, %483, %cst_198 [1] : vector<16x32xf32> to vector<16xf32>
    %485 = vector.shape_cast %484 : vector<16xf32> to vector<16x1xf32>
    %cst_199 = arith.constant 3.200000e+01 : f32
    %486 = vector.broadcast %cst_199 : f32 to vector<16x1xf32>
    %487 = arith.divf %485, %486 : vector<16x1xf32>
    %cst_200 = arith.constant 9.99999974E-6 : f32
    %488 = vector.broadcast %cst_200 : f32 to vector<16x1xf32>
    %489 = arith.addf %487, %488 : vector<16x1xf32>
    %490 = math.rsqrt %489 : vector<16x1xf32>
    %491 = vector.broadcast %490 : vector<16x1xf32> to vector<16x32xf32>
    %492 = arith.mulf %482, %491 : vector<16x32xf32>
    %493 = vector.broadcast %0 : vector<1x32xf32> to vector<16x32xf32>
    %494 = arith.mulf %492, %493 : vector<16x32xf32>
    %495 = vector.broadcast %1 : vector<1x32xf32> to vector<16x32xf32>
    %496 = arith.addf %494, %495 : vector<16x32xf32>
    %497 = vector.broadcast %473 : vector<1x32xf32> to vector<16x32xf32>
    %498 = arith.mulf %496, %497 : vector<16x32xf32>
    %cst_201 = arith.constant dense<0.000000e+00> : vector<16xf32>
    %499 = vector.multi_reduction <add>, %498, %cst_201 [1] : vector<16x32xf32> to vector<16xf32>
    %500 = vector.shape_cast %499 : vector<16xf32> to vector<16x1xf32>
    %501 = arith.negf %500 : vector<16x1xf32>
    %502 = math.exp %501 : vector<16x1xf32>
    %cst_202 = arith.constant 1.000000e+00 : f32
    %503 = vector.broadcast %cst_202 : f32 to vector<16x1xf32>
    %504 = arith.addf %503, %502 : vector<16x1xf32>
    %505 = arith.divf %503, %504 : vector<16x1xf32>
    %c7_203 = arith.constant 7 : index
    %c1_204 = arith.constant 1 : index
    %c0_205 = arith.constant 0 : index
    %506 = vector.load %arg1[%c7_203, %c1_204, %c0_205] : memref<8x18x32xf32, #tpu.memory_space<vmem>>, vector<1x16x32xf32>
    %507 = vector.shape_cast %506 : vector<1x16x32xf32> to vector<16x32xf32>
    %508 = vector.broadcast %505 : vector<16x1xf32> to vector<16x32xf32>
    %509 = vector.broadcast %474 : vector<1x32xf32> to vector<16x32xf32>
    %510 = arith.mulf %508, %509 : vector<16x32xf32>
    %511 = vector.broadcast %2 : vector<1x32xf32> to vector<16x32xf32>
    %512 = arith.addf %510, %511 : vector<16x32xf32>
    %513 = arith.addf %512, %507 : vector<16x32xf32>
    %c7_206 = arith.constant 7 : index
    %c0_207 = arith.constant 0 : index
    %c0_208 = arith.constant 0 : index
    %514 = vector.load %arg7[%c7_206, %c0_207, %c0_208] : memref<8x16x32xf32, #tpu.memory_space<vmem>>, vector<1x16x32xf32>
    %515 = vector.shape_cast %514 : vector<1x16x32xf32> to vector<16x32xf32>
    %516 = vector.shape_cast %513 : vector<16x32xf32> to vector<1x16x32xf32>
    tpu.vector_store %arg7[%c7_206, %c0_207, %c0_208], %516 {strides = array<i32>} : memref<8x16x32xf32, #tpu.memory_space<vmem>>, vector<1x16x32xf32>,
    return
  }
  func.func @transform_0(%arg0: i32) -> (i32, i32, i32) {
    %c0_i32 = arith.constant 0 : i32
    %c0_i32_0 = arith.constant 0 : i32
    %c0_i32_1 = arith.constant 0 : i32
    return %arg0, %c0_i32, %c0_i32_0 : i32, i32, i32
  }
  func.func @transform_1(%arg0: i32) -> (i32, i32) {
    %c0_i32 = arith.constant 0 : i32
    %c0_i32_0 = arith.constant 0 : i32
    %c0_i32_1 = arith.constant 0 : i32
    return %c0_i32, %c0_i32_0 : i32, i32
  }
  func.func @transform_2(%arg0: i32) -> (i32, i32) {
    %c0_i32 = arith.constant 0 : i32
    %c0_i32_0 = arith.constant 0 : i32
    %c0_i32_1 = arith.constant 0 : i32
    return %c0_i32, %c0_i32_0 : i32, i32
  }
  func.func @transform_3(%arg0: i32) -> (i32, i32) {
    %c0_i32 = arith.constant 0 : i32
    %c0_i32_0 = arith.constant 0 : i32
    %c0_i32_1 = arith.constant 0 : i32
    return %c0_i32, %c0_i32_0 : i32, i32
  }
  func.func @transform_4(%arg0: i32) -> (i32, i32) {
    %c0_i32 = arith.constant 0 : i32
    %c0_i32_0 = arith.constant 0 : i32
    %c0_i32_1 = arith.constant 0 : i32
    return %c0_i32, %c0_i32_0 : i32, i32
  }
  func.func @transform_5(%arg0: i32) -> (i32, i32) {
    %c0_i32 = arith.constant 0 : i32
    %c0_i32_0 = arith.constant 0 : i32
    %c0_i32_1 = arith.constant 0 : i32
    return %c0_i32, %c0_i32_0 : i32, i32
  }
  func.func @transform_6(%arg0: i32) -> (i32, i32, i32) {
    %c0_i32 = arith.constant 0 : i32
    %c0_i32_0 = arith.constant 0 : i32
    %c0_i32_1 = arith.constant 0 : i32
    return %arg0, %c0_i32, %c0_i32_0 : i32, i32, i32
  }
}

</mosaic_0001>

<llo_original>
// kernel: tpu_custom_call.1
$region0: #{tpu_custom_call.1}
  #allocation0 [shape = 'u32[]', space=smem, size = 0x4, offset = 0x4, fixed_abs, tag = 'smem constant byte address 0x4 - core index']
  #allocation1 [shape = 'u32[144,128]{1,0:T(1,128)}', space=vmem, size = 0x12000, scoped, tag = 'internal scratch']
  %s0 = inlined_call_operand.vmem [shape: f32[8,18,32], index: 0, kind: input, shape index: {}]
  %s1 = inlined_call_operand.vmem [shape: f32[1,32], index: 1, kind: input, shape index: {}]
  %s2 = inlined_call_operand.vmem [shape: f32[1,32], index: 2, kind: input, shape index: {}]
  %s3 = inlined_call_operand.vmem [shape: f32[32,32], index: 3, kind: input, shape index: {}]
  %s4 = inlined_call_operand.vmem [shape: f32[32,32], index: 4, kind: input, shape index: {}]
  %s5 = inlined_call_operand.vmem [shape: f32[1,32], index: 5, kind: input, shape index: {}]
  %s6 = inlined_call_operand.hbm [shape: f32[8,16,32], index: 6, kind: output, shape index: {}]
  %s7 = sld [smem:[#allocation0]]
  $region34: #{tpu_custom_call.1} parent=0
    _
  %s9 = ssub.s32 1, %s7
  %s10 = scalar_select 0, %s9, %s7
  $region1: #{tpu_custom_call.1} parent=0
    #allocation2 [shape = 'u8[65536]{0}', space=vmem, size = 0x10000, scoped, tag = 'output window, operand 0, single buffered']
    #allocation3 [shape = 's32[1]{0}', space=sflag, size = 0x4, scoped, tag = 'scoped memory for tpu_custom_call.1']
    %11 = vsyncpa [#allocation3], 0
    // Predicated region
    $region2: #{tpu_custom_call.1} parent=1 // pred_check
      _
    $region3: #{tpu_custom_call.1} parent=1 // pred_check_branch
      %13 = sbr.rel (0) target = $region5
    $region4: #{tpu_custom_call.1} parent=1 // pred_region
      _
    $region5: #{tpu_custom_call.1} parent=1 // pred_fallthru
      _
    // Predicated region
    $region6: #{tpu_custom_call.1} parent=1 // pred_check
      _
    $region7: #{tpu_custom_call.1} parent=1 // pred_check_branch
      %15 = sbr.rel (0) target = $region9
    $region8: #{tpu_custom_call.1} parent=1 // pred_region
      _
    $region9: #{tpu_custom_call.1} parent=1 // pred_fallthru
      _
    // Predicated region
    $region10: #{tpu_custom_call.1} parent=1 // pred_check
      _
    $region11: #{tpu_custom_call.1} parent=1 // pred_check_branch
      %17 = sbr.rel (0) target = $region13
    $region12: #{tpu_custom_call.1} parent=1 // pred_region
      _
    $region13: #{tpu_custom_call.1} parent=1 // pred_fallthru
      _
    // Predicated region
    $region14: #{tpu_custom_call.1} parent=1 // pred_check
      _
    $region15: #{tpu_custom_call.1} parent=1 // pred_check_branch
      %19 = sbr.rel (0) target = $region17
    $region16: #{tpu_custom_call.1} parent=1 // pred_region
      _
    $region17: #{tpu_custom_call.1} parent=1 // pred_fallthru
      _
    // Predicated region
    $region18: #{tpu_custom_call.1} parent=1 // pred_check
      _
    $region19: #{tpu_custom_call.1} parent=1 // pred_check_branch
      %21 = sbr.rel (0) target = $region21
    $region20: #{tpu_custom_call.1} parent=1 // pred_region
      _
    $region21: #{tpu_custom_call.1} parent=1 // pred_fallthru
      _
    // Predicated region
    $region22: #{tpu_custom_call.1} parent=1 // pred_check
      _
    $region23: #{tpu_custom_call.1} parent=1 // pred_check_branch
      %23 = sbr.rel (0) target = $region25
    $region24: #{tpu_custom_call.1} parent=1 // pred_region
      _
    $region25: #{tpu_custom_call.1} parent=1 // pred_fallthru
      _
    %v24 = vld [vmem:[%s1] sm:$0x1]
    %v25 = vld [vmem:[%s2] sm:$0x1]
    %v26 = vld [vmem:[%s5] sm:$0x1]
    %v27 = vld [vmem:[%s3] sm:$0xff]
    %v28 = vld [vmem:[%s3 + $0x8] sm:$0xff]
    %v29 = vld [vmem:[%s3 + $0x10] sm:$0xff]
    %v30 = vld [vmem:[%s3 + $0x18] sm:$0xff]
    %v31 = vld [vmem:[%s4] sm:$0xff]
    %v32 = vld [vmem:[%s4 + $0x8] sm:$0xff]
    %v33 = vld [vmem:[%s4 + $0x10] sm:$0xff]
    %v34 = vld [vmem:[%s4 + $0x18] sm:$0xff]
    %v35 = vld [vmem:[%s0] sm:$0x1]
    %vm36 = vcmask 253952
    %v37 = vsel %vm36, %v35, 0.0
    %38 = vadd.xlane.f32.xlu0 %v37
    %v39 = vpop.xlane.xlu0 %38
    %v40 = vrcp.pop 32.0
    %v41 = vmul.f32 %v39, %v40
    %v42 = vsub.f32 %v35, %v41
    %v43 = vmul.f32 %v42, %v42
    %v44 = vsel %vm36, %v43, 0.0
    %45 = vadd.xlane.f32.xlu0 %v44
    %v46 = vpop.xlane.xlu0 %45
    %v47 = vmul.f32 %v46, %v40
    %v48 = vadd.f32 %v47, 1e-05
    %v49 = vrsqrt.pop %v48
    %v50 = vmul.f32 %v42, %v49
    %v51 = vmul.f32 %v50, %v24
    %v52 = vadd.f32 %v51, %v25
    %vm53 = vcmask 261120
    %v55 = vsel %vm53, %v52, 0
    %57 = vmatprep.subr.mxu0 0.0
    %58 = vmatpush1.msra.mxu0 %v27
    %59 = vmatprep.subr.mxu0 0.0
    %60 = vmatpush1.msra.mxu0 %v28
    %61 = vmatprep.subr.mxu0 0.0
    %62 = vmatpush1.msra.mxu0 %v29
    %63 = vmatprep.subr.mxu0 0.0
    %64 = vmatpush1.msra.mxu0 %v30
    %65 = vmatprep.subr.mxu0 0.0
    %66 = vmatpush1.msra.mxu0 0.0
    %67 = vmatprep.subr.mxu0 0.0
    %68 = vmatpush1.msra.mxu0 0.0
    %69 = vmatprep.subr.mxu0 0.0
    %70 = vmatpush1.msra.mxu0 0.0
    %71 = vmatprep.subr.mxu0 0.0
    %72 = vmatpush1.msra.mxu0 0.0
    %73 = vmatprep.subr.mxu0 0.0
    %74 = vmatpush1.msra.mxu0 0.0
    %75 = vmatprep.subr.mxu0 0.0
    %76 = vmatpush1.msra.mxu0 0.0
    %77 = vmatprep.subr.mxu0 0.0
    %78 = vmatpush1.msra.mxu0 0.0
    %79 = vmatprep.subr.mxu0 0.0
    %80 = vmatpush1.msra.mxu0 0.0
    %81 = vmatprep.subr.mxu0 0.0
    %82 = vmatpush1.msra.mxu0 0.0
    %83 = vmatprep.subr.mxu0 0.0
    %84 = vmatpush1.msra.mxu0 0.0
    %85 = vmatprep.subr.mxu0 0.0
    %86 = vmatpush1.msra.mxu0 0.0
    %87 = vmatprep.subr.mxu0 0.0
    %88 = vmatpush1.msra.mxu0 0.0
    %89 = vmatprep.subr.mxu0 0.0
    %90 = vmatpush1.msra.mxu0 0.0
    %91 = vmatprep.subr.mxu0 0.0
    %92 = vmatpush1.msra.mxu0 0.0
    %93 = vmatprep.subr.mxu0 0.0
    %94 = vmatpush1.msra.mxu0 0.0
    %95 = vmatprep.subr.mxu0 0.0
    %96 = vmatpush1.msra.mxu0 0.0
    %97 = vmatprep.subr.mxu0 0.0
    %98 = vmatpush1.msra.mxu0 0.0
    %99 = vmatprep.subr.mxu0 0.0
    %100 = vmatpush1.msra.mxu0 0.0
    %101 = vmatprep.subr.mxu0 0.0
    %102 = vmatpush1.msra.mxu0 0.0
    %103 = vmatprep.subr.mxu0 0.0
    %104 = vmatpush1.msra.mxu0 0.0
    %105 = vmatprep.subr.mxu0 0.0
    %106 = vmatpush1.msra.mxu0 0.0
    %107 = vmatprep.subr.mxu0 0.0
    %108 = vmatpush1.msra.mxu0 0.0
    %109 = vmatprep.subr.mxu0 0.0
    %110 = vmatpush1.msra.mxu0 0.0
    %111 = vmatprep.subr.mxu0 0.0
    %112 = vmatpush1.msra.mxu0 0.0
    %113 = vmatprep.subr.mxu0 0.0
    %114 = vmatpush1.msra.mxu0 0.0
    %115 = vmatprep.subr.mxu0 0.0
    %116 = vmatpush1.msra.mxu0 0.0
    %117 = vmatprep.subr.mxu0 0.0
    %118 = vmatpush1.msra.mxu0 0.0
    %119 = vmatprep.subr.mxu0 0.0
    %120 = vmatpush1.msra.mxu0 0.0
    %121 = vmatprep.mubr.f32.mxu0 0.0
    %122 = vmatmul.mubr.f32.gmra.mrb[0].mxu0 %v55
    %v123 = vpop.f32.mrb[0].mxu0
    %v124 = vadd.f32 0.0, %v123
    %v125 = vpop.f32.mrb[0].mxu0
    %126 = vdwg.mxu0
    %127 = vmatprep.subr.mxu0 0.0
    %128 = vmatpush1.msra.mxu0 %v31
    %129 = vmatprep.subr.mxu0 0.0
    %130 = vmatpush1.msra.mxu0 %v32
    %131 = vmatprep.subr.mxu0 0.0
    %132 = vmatpush1.msra.mxu0 %v33
    %133 = vmatprep.subr.mxu0 0.0
    %134 = vmatpush1.msra.mxu0 %v34
    %135 = vmatprep.subr.mxu0 0.0
    %136 = vmatpush1.msra.mxu0 0.0
    %137 = vmatprep.subr.mxu0 0.0
    %138 = vmatpush1.msra.mxu0 0.0
    %139 = vmatprep.subr.mxu0 0.0
    %140 = vmatpush1.msra.mxu0 0.0
    %141 = vmatprep.subr.mxu0 0.0
    %142 = vmatpush1.msra.mxu0 0.0
    %143 = vmatprep.subr.mxu0 0.0
    %144 = vmatpush1.msra.mxu0 0.0
    %145 = vmatprep.subr.mxu0 0.0
    %146 = vmatpush1.msra.mxu0 0.0
    %147 = vmatprep.subr.mxu0 0.0
    %148 = vmatpush1.msra.mxu0 0.0
    %149 = vmatprep.subr.mxu0 0.0
    %150 = vmatpush1.msra.mxu0 0.0
    %151 = vmatprep.subr.mxu0 0.0
    %152 = vmatpush1.msra.mxu0 0.0
    %153 = vmatprep.subr.mxu0 0.0
    %154 = vmatpush1.msra.mxu0 0.0
    %155 = vmatprep.subr.mxu0 0.0
    %156 = vmatpush1.msra.mxu0 0.0
    %157 = vmatprep.subr.mxu0 0.0
    %158 = vmatpush1.msra.mxu0 0.0
    %159 = vmatprep.subr.mxu0 0.0
    %160 = vmatpush1.msra.mxu0 0.0
    %161 = vmatprep.subr.mxu0 0.0
    %162 = vmatpush1.msra.mxu0 0.0
    %163 = vmatprep.subr.mxu0 0.0
    %164 = vmatpush1.msra.mxu0 0.0
    %165 = vmatprep.subr.mxu0 0.0
    %166 = vmatpush1.msra.mxu0 0.0
    %167 = vmatprep.subr.mxu0 0.0
    %168 = vmatpush1.msra.mxu0 0.0
    %169 = vmatprep.subr.mxu0 0.0
    %170 = vmatpush1.msra.mxu0 0.0
    %171 = vmatprep.subr.mxu0 0.0
    %172 = vmatpush1.msra.mxu0 0.0
    %173 = vmatprep.subr.mxu0 0.0
    %174 = vmatpush1.msra.mxu0 0.0
    %175 = vmatprep.subr.mxu0 0.0
    %176 = vmatpush1.msra.mxu0 0.0
    %177 = vmatprep.subr.mxu0 0.0
    %178 = vmatpush1.msra.mxu0 0.0
    %179 = vmatprep.subr.mxu0 0.0
    %180 = vmatpush1.msra.mxu0 0.0
    %181 = vmatprep.subr.mxu0 0.0
    %182 = vmatpush1.msra.mxu0 0.0
    %183 = vmatprep.subr.mxu0 0.0
    %184 = vmatpush1.msra.mxu0 0.0
    %185 = vmatprep.subr.mxu0 0.0
    %186 = vmatpush1.msra.mxu0 0.0
    %187 = vmatprep.subr.mxu0 0.0
    %188 = vmatpush1.msra.mxu0 0.0
    %189 = vmatprep.subr.mxu0 0.0
    %190 = vmatpush1.msra.mxu0 0.0
    %191 = vmatprep.mubr.f32.mxu0 0.0
    %192 = vmatmul.mubr.f32.gmra.mrb[0].mxu0 %v55
    %v193 = vpop.f32.mrb[0].mxu0
    %v194 = vadd.f32 0.0, %v193
    %v195 = vpop.f32.mrb[0].mxu0
    %196 = vdwg.mxu0
    %v197 = vld [vmem:[%s0 + $0x1] sm:$0xff]
    %v198 = vld [vmem:[%s0 + $0x9] sm:$0xff]
    %v199 = vsel %vm53, %v197, 0.0
    %200 = vadd.xlane.f32.xlu0 %v199
    %v201 = vpop.xlane.xlu0 %200
    %v202 = vsel %vm53, %v198, 0.0
    %203 = vadd.xlane.f32.xlu0 %v202
    %v204 = vpop.xlane.xlu0 %203
    %v205 = vmul.f32 %v201, %v40
    %v206 = vmul.f32 %v204, %v40
    %v207 = vsub.f32 %v197, %v205
    %v208 = vsub.f32 %v198, %v206
    %v209 = vmul.f32 %v207, %v207
    %v210 = vmul.f32 %v208, %v208
    %v211 = vsel %vm53, %v209, 0.0
    %212 = vadd.xlane.f32.xlu0 %v211
    %v213 = vpop.xlane.xlu0 %212
    %v214 = vsel %vm53, %v210, 0.0
    %215 = vadd.xlane.f32.xlu0 %v214
    %v216 = vpop.xlane.xlu0 %215
    %v217 = vmul.f32 %v213, %v40
    %v218 = vmul.f32 %v216, %v40
    %v219 = vadd.f32 %v217, 1e-05
    %v220 = vadd.f32 %v218, 1e-05
    %v221 = vrsqrt.pop %v219
    %v222 = vrsqrt.pop %v220
    %v223 = vmul.f32 %v207, %v221
    %v224 = vmul.f32 %v208, %v222
    %v226 = vlaneseq
    %v227 = vshrl.u32 %v226, 7
    %v228 = vsub.s32 0, %v227
    %v229 = vrot.slane %v24, %v228
    %v231 = vmul.f32 %v223, %v229
    %v232 = vmul.f32 %v224, %v229
    %v234 = vlaneseq
    %v235 = vshrl.u32 %v234, 7
    %v236 = vsub.s32 0, %v235
    %v237 = vrot.slane %v25, %v236
    %v239 = vadd.f32 %v231, %v237
    %v240 = vadd.f32 %v232, %v237
    %v241 = vlaneseq
    %v242 = vshrl.u32 %v241, 7
    %v243 = vsub.s32 0, %v242
    %v244 = vrot.slane %v124, %v243
    %v245 = vmul.f32 %v239, %v244
    %v246 = vmul.f32 %v240, %v244
    %v247 = vsel %vm53, %v245, 0.0
    %248 = vadd.xlane.f32.xlu0 %v247
    %v249 = vpop.xlane.xlu0 %248
    %v250 = vsel %vm53, %v246, 0.0
    %251 = vadd.xlane.f32.xlu0 %v250
    %v252 = vpop.xlane.xlu0 %251
    %v253 = vxor.u32 %v249, 2147483648
    %v254 = vxor.u32 %v252, 2147483648
    %v255 = vmul.f32 %v253, 1.442695
    %v256 = vpow.pop %v255
    %v257 = vmul.f32 %v254, 1.442695
    %v258 = vpow.pop %v257
    %v259 = vadd.f32 %v256, 1.0
    %v260 = vadd.f32 %v258, 1.0
    %v261 = vrcp.pop %v259
    %v262 = vmul.f32 1.0, %v261
    %v263 = vrcp.pop %v260
    %v264 = vmul.f32 1.0, %v263
    %v265 = vlaneseq
    %v266 = vshrl.u32 %v265, 7
    %v267 = vsub.s32 0, %v266
    %v268 = vrot.slane %v194, %v267
    %v269 = vmul.f32 %v262, %v268
    %v270 = vmul.f32 %v264, %v268
    %v272 = vlaneseq
    %v273 = vshrl.u32 %v272, 7
    %v274 = vsub.s32 0, %v273
    %v275 = vrot.slane %v26, %v274
    %v277 = vadd.f32 %v269, %v275
    %v278 = vadd.f32 %v270, %v275
    %v279 = vadd.f32 %v277, %v197
    %v280 = vadd.f32 %v278, %v198
    %281 = vst.msk [vmem:[#allocation2] sm:$0xff] %vm53, %v279
    %282 = vst.msk [vmem:[#allocation2 + $0x8] sm:$0xff] %vm53, %v280
    %s283 = scalar_lea.vmem %s0, 24
    %v284 = vld [vmem:[%s283] sm:$0x1]
    %v285 = vsel %vm36, %v284, 0.0
    %286 = vadd.xlane.f32.xlu0 %v285
    %v287 = vpop.xlane.xlu0 %286
    %v288 = vmul.f32 %v287, %v40
    %v289 = vsub.f32 %v284, %v288
    %v290 = vmul.f32 %v289, %v289
    %v291 = vsel %vm36, %v290, 0.0
    %292 = vadd.xlane.f32.xlu0 %v291
    %v293 = vpop.xlane.xlu0 %292
    %v294 = vmul.f32 %v293, %v40
    %v295 = vadd.f32 %v294, 1e-05
    %v296 = vrsqrt.pop %v295
    %v297 = vmul.f32 %v289, %v296
    %v298 = vmul.f32 %v297, %v24
    %v299 = vadd.f32 %v298, %v25
    %v301 = vsel %vm53, %v299, 0
    %303 = vmatprep.subr.mxu0 0.0
    %304 = vmatpush1.msra.mxu0 %v27
    %305 = vmatprep.subr.mxu0 0.0
    %306 = vmatpush1.msra.mxu0 %v28
    %307 = vmatprep.subr.mxu0 0.0
    %308 = vmatpush1.msra.mxu0 %v29
    %309 = vmatprep.subr.mxu0 0.0
    %310 = vmatpush1.msra.mxu0 %v30
    %311 = vmatprep.subr.mxu0 0.0
    %312 = vmatpush1.msra.mxu0 0.0
    %313 = vmatprep.subr.mxu0 0.0
    %314 = vmatpush1.msra.mxu0 0.0
    %315 = vmatprep.subr.mxu0 0.0
    %316 = vmatpush1.msra.mxu0 0.0
    %317 = vmatprep.subr.mxu0 0.0
    %318 = vmatpush1.msra.mxu0 0.0
    %319 = vmatprep.subr.mxu0 0.0
    %320 = vmatpush1.msra.mxu0 0.0
    %321 = vmatprep.subr.mxu0 0.0
    %322 = vmatpush1.msra.mxu0 0.0
    %323 = vmatprep.subr.mxu0 0.0
    %324 = vmatpush1.msra.mxu0 0.0
    %325 = vmatprep.subr.mxu0 0.0
    %326 = vmatpush1.msra.mxu0 0.0
    %327 = vmatprep.subr.mxu0 0.0
    %328 = vmatpush1.msra.mxu0 0.0
    %329 = vmatprep.subr.mxu0 0.0
    %330 = vmatpush1.msra.mxu0 0.0
    %331 = vmatprep.subr.mxu0 0.0
    %332 = vmatpush1.msra.mxu0 0.0
    %333 = vmatprep.subr.mxu0 0.0
    %334 = vmatpush1.msra.mxu0 0.0
    %335 = vmatprep.subr.mxu0 0.0
    %336 = vmatpush1.msra.mxu0 0.0
    %337 = vmatprep.subr.mxu0 0.0
    %338 = vmatpush1.msra.mxu0 0.0
    %339 = vmatprep.subr.mxu0 0.0
    %340 = vmatpush1.msra.mxu0 0.0
    %341 = vmatprep.subr.mxu0 0.0
    %342 = vmatpush1.msra.mxu0 0.0
    %343 = vmatprep.subr.mxu0 0.0
    %344 = vmatpush1.msra.mxu0 0.0
    %345 = vmatprep.subr.mxu0 0.0
    %346 = vmatpush1.msra.mxu0 0.0
    %347 = vmatprep.subr.mxu0 0.0
    %348 = vmatpush1.msra.mxu0 0.0
    %349 = vmatprep.subr.mxu0 0.0
    %350 = vmatpush1.msra.mxu0 0.0
    %351 = vmatprep.subr.mxu0 0.0
    %352 = vmatpush1.msra.mxu0 0.0
    %353 = vmatprep.subr.mxu0 0.0
    %354 = vmatpush1.msra.mxu0 0.0
    %355 = vmatprep.subr.mxu0 0.0
    %356 = vmatpush1.msra.mxu0 0.0
    %357 = vmatprep.subr.mxu0 0.0
    %358 = vmatpush1.msra.mxu0 0.0
    %359 = vmatprep.subr.mxu0 0.0
    %360 = vmatpush1.msra.mxu0 0.0
    %361 = vmatprep.subr.mxu0 0.0
    %362 = vmatpush1.msra.mxu0 0.0
    %363 = vmatprep.subr.mxu0 0.0
    %364 = vmatpush1.msra.mxu0 0.0
    %365 = vmatprep.subr.mxu0 0.0
    %366 = vmatpush1.msra.mxu0 0.0
    %367 = vmatprep.mubr.f32.mxu0 0.0
    %368 = vmatmul.mubr.f32.gmra.mrb[0].mxu0 %v301
    %v369 = vpop.f32.mrb[0].mxu0
    %v370 = vadd.f32 0.0, %v369
    %v371 = vpop.f32.mrb[0].mxu0
    %372 = vdwg.mxu0
    %373 = vmatprep.subr.mxu0 0.0
    %374 = vmatpush1.msra.mxu0 %v31
    %375 = vmatprep.subr.mxu0 0.0
    %376 = vmatpush1.msra.mxu0 %v32
    %377 = vmatprep.subr.mxu0 0.0
    %378 = vmatpush1.msra.mxu0 %v33
    %379 = vmatprep.subr.mxu0 0.0
    %380 = vmatpush1.msra.mxu0 %v34
    %381 = vmatprep.subr.mxu0 0.0
    %382 = vmatpush1.msra.mxu0 0.0
    %383 = vmatprep.subr.mxu0 0.0
    %384 = vmatpush1.msra.mxu0 0.0
    %385 = vmatprep.subr.mxu0 0.0
    %386 = vmatpush1.msra.mxu0 0.0
    %387 = vmatprep.subr.mxu0 0.0
    %388 = vmatpush1.msra.mxu0 0.0
    %389 = vmatprep.subr.mxu0 0.0
    %390 = vmatpush1.msra.mxu0 0.0
    %391 = vmatprep.subr.mxu0 0.0
    %392 = vmatpush1.msra.mxu0 0.0
    %393 = vmatprep.subr.mxu0 0.0
    %394 = vmatpush1.msra.mxu0 0.0
    %395 = vmatprep.subr.mxu0 0.0
    %396 = vmatpush1.msra.mxu0 0.0
    %397 = vmatprep.subr.mxu0 0.0
    %398 = vmatpush1.msra.mxu0 0.0
    %399 = vmatprep.subr.mxu0 0.0
    %400 = vmatpush1.msra.mxu0 0.0
    %401 = vmatprep.subr.mxu0 0.0
    %402 = vmatpush1.msra.mxu0 0.0
    %403 = vmatprep.subr.mxu0 0.0
    %404 = vmatpush1.msra.mxu0 0.0
    %405 = vmatprep.subr.mxu0 0.0
    %406 = vmatpush1.msra.mxu0 0.0
    %407 = vmatprep.subr.mxu0 0.0
    %408 = vmatpush1.msra.mxu0 0.0
    %409 = vmatprep.subr.mxu0 0.0
    %410 = vmatpush1.msra.mxu0 0.0
    %411 = vmatprep.subr.mxu0 0.0
    %412 = vmatpush1.msra.mxu0 0.0
    %413 = vmatprep.subr.mxu0 0.0
    %414 = vmatpush1.msra.mxu0 0.0
    %415 = vmatprep.subr.mxu0 0.0
    %416 = vmatpush1.msra.mxu0 0.0
    %417 = vmatprep.subr.mxu0 0.0
    %418 = vmatpush1.msra.mxu0 0.0
    %419 = vmatprep.subr.mxu0 0.0
    %420 = vmatpush1.msra.mxu0 0.0
    %421 = vmatprep.subr.mxu0 0.0
    %422 = vmatpush1.msra.mxu0 0.0
    %423 = vmatprep.subr.mxu0 0.0
    %424 = vmatpush1.msra.mxu0 0.0
    %425 = vmatprep.subr.mxu0 0.0
    %426 = vmatpush1.msra.mxu0 0.0
    %427 = vmatprep.subr.mxu0 0.0
    %428 = vmatpush1.msra.mxu0 0.0
    %429 = vmatprep.subr.mxu0 0.0
    %430 = vmatpush1.msra.mxu0 0.0
    %431 = vmatprep.subr.mxu0 0.0
    %432 = vmatpush1.msra.mxu0 0.0
    %433 = vmatprep.subr.mxu0 0.0
    %434 = vmatpush1.msra.mxu0 0.0
    %435 = vmatprep.subr.mxu0 0.0
    %436 = vmatpush1.msra.mxu0 0.0
    %437 = vmatprep.mubr.f32.mxu0 0.0
    %438 = vmatmul.mubr.f32.gmra.mrb[0].mxu0 %v301
    %v439 = vpop.f32.mrb[0].mxu0
    %v440 = vadd.f32 0.0, %v439
    %v441 = vpop.f32.mrb[0].mxu0
    %442 = vdwg.mxu0
    %v443 = vld [vmem:[%s283 + $0x1] sm:$0xff]
    %v444 = vld [vmem:[%s283 + $0x9] sm:$0xff]
    %v445 = vsel %vm53, %v443, 0.0
    %446 = vadd.xlane.f32.xlu0 %v445
    %v447 = vpop.xlane.xlu0 %446
    %v448 = vsel %vm53, %v444, 0.0
    %449 = vadd.xlane.f32.xlu0 %v448
    %v450 = vpop.xlane.xlu0 %449
    %v451 = vmul.f32 %v447, %v40
    %v452 = vmul.f32 %v450, %v40
    %v453 = vsub.f32 %v443, %v451
    %v454 = vsub.f32 %v444, %v452
    %v455 = vmul.f32 %v453, %v453
    %v456 = vmul.f32 %v454, %v454
    %v457 = vsel %vm53, %v455, 0.0
    %458 = vadd.xlane.f32.xlu0 %v457
    %v459 = vpop.xlane.xlu0 %458
    %v460 = vsel %vm53, %v456, 0.0
    %461 = vadd.xlane.f32.xlu0 %v460
    %v462 = vpop.xlane.xlu0 %461
    %v463 = vmul.f32 %v459, %v40
    %v464 = vmul.f32 %v462, %v40
    %v465 = vadd.f32 %v463, 1e-05
    %v466 = vadd.f32 %v464, 1e-05
    %v467 = vrsqrt.pop %v465
    %v468 = vrsqrt.pop %v466
    %v469 = vmul.f32 %v453, %v467
    %v470 = vmul.f32 %v454, %v468
    %v471 = vmul.f32 %v469, %v229
    %v472 = vmul.f32 %v470, %v229
    %v473 = vadd.f32 %v471, %v237
    %v474 = vadd.f32 %v472, %v237
    %v475 = vlaneseq
    %v476 = vshrl.u32 %v475, 7
    %v477 = vsub.s32 0, %v476
    %v478 = vrot.slane %v370, %v477
    %v479 = vmul.f32 %v473, %v478
    %v480 = vmul.f32 %v474, %v478
    %v481 = vsel %vm53, %v479, 0.0
    %482 = vadd.xlane.f32.xlu0 %v481
    %v483 = vpop.xlane.xlu0 %482
    %v484 = vsel %vm53, %v480, 0.0
    %485 = vadd.xlane.f32.xlu0 %v484
    %v486 = vpop.xlane.xlu0 %485
    %v487 = vxor.u32 %v483, 2147483648
    %v488 = vxor.u32 %v486, 2147483648
    %v489 = vmul.f32 %v487, 1.442695
    %v490 = vpow.pop %v489
    %v491 = vmul.f32 %v488, 1.442695
    %v492 = vpow.pop %v491
    %v493 = vadd.f32 %v490, 1.0
    %v494 = vadd.f32 %v492, 1.0
    %v495 = vrcp.pop %v493
    %v496 = vmul.f32 1.0, %v495
    %v497 = vrcp.pop %v494
    %v498 = vmul.f32 1.0, %v497
    %v499 = vlaneseq
    %v500 = vshrl.u32 %v499, 7
    %v501 = vsub.s32 0, %v500
    %v502 = vrot.slane %v440, %v501
    %v503 = vmul.f32 %v496, %v502
    %v504 = vmul.f32 %v498, %v502
    %v505 = vadd.f32 %v503, %v275
    %v506 = vadd.f32 %v504, %v275
    %v507 = vadd.f32 %v505, %v443
    %v508 = vadd.f32 %v506, %v444
    %s509 = scalar_lea.vmem [#allocation2], 16
    %510 = vst.msk [vmem:[%s509] sm:$0xff] %vm53, %v507
    %511 = vst.msk [vmem:[%s509 + $0x8] sm:$0xff] %vm53, %v508
    %s512 = scalar_lea.vmem %s0, 48
    %v513 = vld [vmem:[%s512] sm:$0x1]
    %v514 = vsel %vm36, %v513, 0.0
    %515 = vadd.xlane.f32.xlu0 %v514
    %v516 = vpop.xlane.xlu0 %515
    %v517 = vmul.f32 %v516, %v40
    %v518 = vsub.f32 %v513, %v517
    %v519 = vmul.f32 %v518, %v518
    %v520 = vsel %vm36, %v519, 0.0
    %521 = vadd.xlane.f32.xlu0 %v520
    %v522 = vpop.xlane.xlu0 %521
    %v523 = vmul.f32 %v522, %v40
    %v524 = vadd.f32 %v523, 1e-05
    %v525 = vrsqrt.pop %v524
    %v526 = vmul.f32 %v518, %v525
    %v527 = vmul.f32 %v526, %v24
    %v528 = vadd.f32 %v527, %v25
    %v530 = vsel %vm53, %v528, 0
    %532 = vmatprep.subr.mxu0 0.0
    %533 = vmatpush1.msra.mxu0 %v27
    %534 = vmatprep.subr.mxu0 0.0
    %535 = vmatpush1.msra.mxu0 %v28
    %536 = vmatprep.subr.mxu0 0.0
    %537 = vmatpush1.msra.mxu0 %v29
    %538 = vmatprep.subr.mxu0 0.0
    %539 = vmatpush1.msra.mxu0 %v30
    %540 = vmatprep.subr.mxu0 0.0
    %541 = vmatpush1.msra.mxu0 0.0
    %542 = vmatprep.subr.mxu0 0.0
    %543 = vmatpush1.msra.mxu0 0.0
    %544 = vmatprep.subr.mxu0 0.0
    %545 = vmatpush1.msra.mxu0 0.0
    %546 = vmatprep.subr.mxu0 0.0
    %547 = vmatpush1.msra.mxu0 0.0
    %548 = vmatprep.subr.mxu0 0.0
    %549 = vmatpush1.msra.mxu0 0.0
    %550 = vmatprep.subr.mxu0 0.0
    %551 = vmatpush1.msra.mxu0 0.0
    %552 = vmatprep.subr.mxu0 0.0
    %553 = vmatpush1.msra.mxu0 0.0
    %554 = vmatprep.subr.mxu0 0.0
    %555 = vmatpush1.msra.mxu0 0.0
    %556 = vmatprep.subr.mxu0 0.0
    %557 = vmatpush1.msra.mxu0 0.0
    %558 = vmatprep.subr.mxu0 0.0
    %559 = vmatpush1.msra.mxu0 0.0
    %560 = vmatprep.subr.mxu0 0.0
    %561 = vmatpush1.msra.mxu0 0.0
    %562 = vmatprep.subr.mxu0 0.0
    %563 = vmatpush1.msra.mxu0 0.0
    %564 = vmatprep.subr.mxu0 0.0
    %565 = vmatpush1.msra.mxu0 0.0
    %566 = vmatprep.subr.mxu0 0.0
    %567 = vmatpush1.msra.mxu0 0.0
    %568 = vmatprep.subr.mxu0 0.0
    %569 = vmatpush1.msra.mxu0 0.0
    %570 = vmatprep.subr.mxu0 0.0
    %571 = vmatpush1.msra.mxu0 0.0
    %572 = vmatprep.subr.mxu0 0.0
    %573 = vmatpush1.msra.mxu0 0.0
    %574 = vmatprep.subr.mxu0 0.0
    %575 = vmatpush1.msra.mxu0 0.0
    %576 = vmatprep.subr.mxu0 0.0
    %577 = vmatpush1.msra.mxu0 0.0
    %578 = vmatprep.subr.mxu0 0.0
    %579 = vmatpush1.msra.mxu0 0.0
    %580 = vmatprep.subr.mxu0 0.0
    %581 = vmatpush1.msra.mxu0 0.0
    %582 = vmatprep.subr.mxu0 0.0
    %583 = vmatpush1.msra.mxu0 0.0
    %584 = vmatprep.subr.mxu0 0.0
    %585 = vmatpush1.msra.mxu0 0.0
    %586 = vmatprep.subr.mxu0 0.0
    %587 = vmatpush1.msra.mxu0 0.0
    %588 = vmatprep.subr.mxu0 0.0
    %589 = vmatpush1.msra.mxu0 0.0
    %590 = vmatprep.subr.mxu0 0.0
    %591 = vmatpush1.msra.mxu0 0.0
    %592 = vmatprep.subr.mxu0 0.0
    %593 = vmatpush1.msra.mxu0 0.0
    %594 = vmatprep.subr.mxu0 0.0
    %595 = vmatpush1.msra.mxu0 0.0
    %596 = vmatprep.mubr.f32.mxu0 0.0
    %597 = vmatmul.mubr.f32.gmra.mrb[0].mxu0 %v530
    %v598 = vpop.f32.mrb[0].mxu0
    %v599 = vadd.f32 0.0, %v598
    %v600 = vpop.f32.mrb[0].mxu0
    %601 = vdwg.mxu0
    %602 = vmatprep.subr.mxu0 0.0
    %603 = vmatpush1.msra.mxu0 %v31
    %604 = vmatprep.subr.mxu0 0.0
    %605 = vmatpush1.msra.mxu0 %v32
    %606 = vmatprep.subr.mxu0 0.0
    %607 = vmatpush1.msra.mxu0 %v33
    %608 = vmatprep.subr.mxu0 0.0
    %609 = vmatpush1.msra.mxu0 %v34
    %610 = vmatprep.subr.mxu0 0.0
    %611 = vmatpush1.msra.mxu0 0.0
    %612 = vmatprep.subr.mxu0 0.0
    %613 = vmatpush1.msra.mxu0 0.0
    %614 = vmatprep.subr.mxu0 0.0
    %615 = vmatpush1.msra.mxu0 0.0
    %616 = vmatprep.subr.mxu0 0.0
    %617 = vmatpush1.msra.mxu0 0.0
    %618 = vmatprep.subr.mxu0 0.0
    %619 = vmatpush1.msra.mxu0 0.0
    %620 = vmatprep.subr.mxu0 0.0
    %621 = vmatpush1.msra.mxu0 0.0
    %622 = vmatprep.subr.mxu0 0.0
    %623 = vmatpush1.msra.mxu0 0.0
    %624 = vmatprep.subr.mxu0 0.0
    %625 = vmatpush1.msra.mxu0 0.0
    %626 = vmatprep.subr.mxu0 0.0
    %627 = vmatpush1.msra.mxu0 0.0
    %628 = vmatprep.subr.mxu0 0.0
    %629 = vmatpush1.msra.mxu0 0.0
    %630 = vmatprep.subr.mxu0 0.0
    %631 = vmatpush1.msra.mxu0 0.0
    %632 = vmatprep.subr.mxu0 0.0
    %633 = vmatpush1.msra.mxu0 0.0
    %634 = vmatprep.subr.mxu0 0.0
    %635 = vmatpush1.msra.mxu0 0.0
    %636 = vmatprep.subr.mxu0 0.0
    %637 = vmatpush1.msra.mxu0 0.0
    %638 = vmatprep.subr.mxu0 0.0
    %639 = vmatpush1.msra.mxu0 0.0
    %640 = vmatprep.subr.mxu0 0.0
    %641 = vmatpush1.msra.mxu0 0.0
    %642 = vmatprep.subr.mxu0 0.0
    %643 = vmatpush1.msra.mxu0 0.0
    %644 = vmatprep.subr.mxu0 0.0
    %645 = vmatpush1.msra.mxu0 0.0
    %646 = vmatprep.subr.mxu0 0.0
    %647 = vmatpush1.msra.mxu0 0.0
    %648 = vmatprep.subr.mxu0 0.0
    %649 = vmatpush1.msra.mxu0 0.0
    %650 = vmatprep.subr.mxu0 0.0
    %651 = vmatpush1.msra.mxu0 0.0
    %652 = vmatprep.subr.mxu0 0.0
    %653 = vmatpush1.msra.mxu0 0.0
    %654 = vmatprep.subr.mxu0 0.0
    %655 = vmatpush1.msra.mxu0 0.0
    %656 = vmatprep.subr.mxu0 0.0
    %657 = vmatpush1.msra.mxu0 0.0
    %658 = vmatprep.subr.mxu0 0.0
    %659 = vmatpush1.msra.mxu0 0.0
    %660 = vmatprep.subr.mxu0 0.0
    %661 = vmatpush1.msra.mxu0 0.0
    %662 = vmatprep.subr.mxu0 0.0
    %663 = vmatpush1.msra.mxu0 0.0
    %664 = vmatprep.subr.mxu0 0.0
    %665 = vmatpush1.msra.mxu0 0.0
    %666 = vmatprep.mubr.f32.mxu0 0.0
    %667 = vmatmul.mubr.f32.gmra.mrb[0].mxu0 %v530
    %v668 = vpop.f32.mrb[0].mxu0
    %v669 = vadd.f32 0.0, %v668
    %v670 = vpop.f32.mrb[0].mxu0
    %671 = vdwg.mxu0
    %v672 = vld [vmem:[%s512 + $0x1] sm:$0xff]
    %v673 = vld [vmem:[%s512 + $0x9] sm:$0xff]
    %v674 = vsel %vm53, %v672, 0.0
    %675 = vadd.xlane.f32.xlu0 %v674
    %v676 = vpop.xlane.xlu0 %675
    %v677 = vsel %vm53, %v673, 0.0
    %678 = vadd.xlane.f32.xlu0 %v677
    %v679 = vpop.xlane.xlu0 %678
    %v680 = vmul.f32 %v676, %v40
    %v681 = vmul.f32 %v679, %v40
    %v682 = vsub.f32 %v672, %v680
    %v683 = vsub.f32 %v673, %v681
    %v684 = vmul.f32 %v682, %v682
    %v685 = vmul.f32 %v683, %v683
    %v686 = vsel %vm53, %v684, 0.0
    %687 = vadd.xlane.f32.xlu0 %v686
    %v688 = vpop.xlane.xlu0 %687
    %v689 = vsel %vm53, %v685, 0.0
    %690 = vadd.xlane.f32.xlu0 %v689
    %v691 = vpop.xlane.xlu0 %690
    %v692 = vmul.f32 %v688, %v40
    %v693 = vmul.f32 %v691, %v40
    %v694 = vadd.f32 %v692, 1e-05
    %v695 = vadd.f32 %v693, 1e-05
    %v696 = vrsqrt.pop %v694
    %v697 = vrsqrt.pop %v695
    %v698 = vmul.f32 %v682, %v696
    %v699 = vmul.f32 %v683, %v697
    %v700 = vmul.f32 %v698, %v229
    %v701 = vmul.f32 %v699, %v229
    %v702 = vadd.f32 %v700, %v237
    %v703 = vadd.f32 %v701, %v237
    %v704 = vlaneseq
    %v705 = vshrl.u32 %v704, 7
    %v706 = vsub.s32 0, %v705
    %v707 = vrot.slane %v599, %v706
    %v708 = vmul.f32 %v702, %v707
    %v709 = vmul.f32 %v703, %v707
    %v710 = vsel %vm53, %v708, 0.0
    %711 = vadd.xlane.f32.xlu0 %v710
    %v712 = vpop.xlane.xlu0 %711
    %v713 = vsel %vm53, %v709, 0.0
    %714 = vadd.xlane.f32.xlu0 %v713
    %v715 = vpop.xlane.xlu0 %714
    %v716 = vxor.u32 %v712, 2147483648
    %v717 = vxor.u32 %v715, 2147483648
    %v718 = vmul.f32 %v716, 1.442695
    %v719 = vpow.pop %v718
    %v720 = vmul.f32 %v717, 1.442695
    %v721 = vpow.pop %v720
    %v722 = vadd.f32 %v719, 1.0
    %v723 = vadd.f32 %v721, 1.0
    %v724 = vrcp.pop %v722
    %v725 = vmul.f32 1.0, %v724
    %v726 = vrcp.pop %v723
    %v727 = vmul.f32 1.0, %v726
    %v728 = vlaneseq
    %v729 = vshrl.u32 %v728, 7
    %v730 = vsub.s32 0, %v729
    %v731 = vrot.slane %v669, %v730
    %v732 = vmul.f32 %v725, %v731
    %v733 = vmul.f32 %v727, %v731
    %v734 = vadd.f32 %v732, %v275
    %v735 = vadd.f32 %v733, %v275
    %v736 = vadd.f32 %v734, %v672
    %v737 = vadd.f32 %v735, %v673
    %s738 = scalar_lea.vmem [#allocation2], 32
    %739 = vst.msk [vmem:[%s738] sm:$0xff] %vm53, %v736
    %740 = vst.msk [vmem:[%s738 + $0x8] sm:$0xff] %vm53, %v737
    %s741 = scalar_lea.vmem %s0, 72
    %v742 = vld [vmem:[%s741] sm:$0x1]
    %v743 = vsel %vm36, %v742, 0.0
    %744 = vadd.xlane.f32.xlu0 %v743
    %v745 = vpop.xlane.xlu0 %744
    %v746 = vmul.f32 %v745, %v40
    %v747 = vsub.f32 %v742, %v746
    %v748 = vmul.f32 %v747, %v747
    %v749 = vsel %vm36, %v748, 0.0
    %750 = vadd.xlane.f32.xlu0 %v749
    %v751 = vpop.xlane.xlu0 %750
    %v752 = vmul.f32 %v751, %v40
    %v753 = vadd.f32 %v752, 1e-05
    %v754 = vrsqrt.pop %v753
    %v755 = vmul.f32 %v747, %v754
    %v756 = vmul.f32 %v755, %v24
    %v757 = vadd.f32 %v756, %v25
    %v759 = vsel %vm53, %v757, 0
    %761 = vmatprep.subr.mxu0 0.0
    %762 = vmatpush1.msra.mxu0 %v27
    %763 = vmatprep.subr.mxu0 0.0
    %764 = vmatpush1.msra.mxu0 %v28
    %765 = vmatprep.subr.mxu0 0.0
    %766 = vmatpush1.msra.mxu0 %v29
    %767 = vmatprep.subr.mxu0 0.0
    %768 = vmatpush1.msra.mxu0 %v30
    %769 = vmatprep.subr.mxu0 0.0
    %770 = vmatpush1.msra.mxu0 0.0
    %771 = vmatprep.subr.mxu0 0.0
    %772 = vmatpush1.msra.mxu0 0.0
    %773 = vmatprep.subr.mxu0 0.0
    %774 = vmatpush1.msra.mxu0 0.0
    %775 = vmatprep.subr.mxu0 0.0
    %776 = vmatpush1.msra.mxu0 0.0
    %777 = vmatprep.subr.mxu0 0.0
    %778 = vmatpush1.msra.mxu0 0.0
    %779 = vmatprep.subr.mxu0 0.0
    %780 = vmatpush1.msra.mxu0 0.0
    %781 = vmatprep.subr.mxu0 0.0
    %782 = vmatpush1.msra.mxu0 0.0
    %783 = vmatprep.subr.mxu0 0.0
    %784 = vmatpush1.msra.mxu0 0.0
    %785 = vmatprep.subr.mxu0 0.0
    %786 = vmatpush1.msra.mxu0 0.0
    %787 = vmatprep.subr.mxu0 0.0
    %788 = vmatpush1.msra.mxu0 0.0
    %789 = vmatprep.subr.mxu0 0.0
    %790 = vmatpush1.msra.mxu0 0.0
    %791 = vmatprep.subr.mxu0 0.0
    %792 = vmatpush1.msra.mxu0 0.0
    %793 = vmatprep.subr.mxu0 0.0
    %794 = vmatpush1.msra.mxu0 0.0
    %795 = vmatprep.subr.mxu0 0.0
    %796 = vmatpush1.msra.mxu0 0.0
    %797 = vmatprep.subr.mxu0 0.0
    %798 = vmatpush1.msra.mxu0 0.0
    %799 = vmatprep.subr.mxu0 0.0
    %800 = vmatpush1.msra.mxu0 0.0
    %801 = vmatprep.subr.mxu0 0.0
    %802 = vmatpush1.msra.mxu0 0.0
    %803 = vmatprep.subr.mxu0 0.0
    %804 = vmatpush1.msra.mxu0 0.0
    %805 = vmatprep.subr.mxu0 0.0
    %806 = vmatpush1.msra.mxu0 0.0
    %807 = vmatprep.subr.mxu0 0.0
    %808 = vmatpush1.msra.mxu0 0.0
    %809 = vmatprep.subr.mxu0 0.0
    %810 = vmatpush1.msra.mxu0 0.0
    %811 = vmatprep.subr.mxu0 0.0
    %812 = vmatpush1.msra.mxu0 0.0
    %813 = vmatprep.subr.mxu0 0.0
    %814 = vmatpush1.msra.mxu0 0.0
    %815 = vmatprep.subr.mxu0 0.0
    %816 = vmatpush1.msra.mxu0 0.0
    %817 = vmatprep.subr.mxu0 0.0
    %818 = vmatpush1.msra.mxu0 0.0
    %819 = vmatprep.subr.mxu0 0.0
    %820 = vmatpush1.msra.mxu0 0.0
    %821 = vmatprep.subr.mxu0 0.0
    %822 = vmatpush1.msra.mxu0 0.0
    %823 = vmatprep.subr.mxu0 0.0
    %824 = vmatpush1.msra.mxu0 0.0
    %825 = vmatprep.mubr.f32.mxu0 0.0
    %826 = vmatmul.mubr.f32.gmra.mrb[0].mxu0 %v759
    %v827 = vpop.f32.mrb[0].mxu0
    %v828 = vadd.f32 0.0, %v827
    %v829 = vpop.f32.mrb[0].mxu0
    %830 = vdwg.mxu0
    %831 = vmatprep.subr.mxu0 0.0
    %832 = vmatpush1.msra.mxu0 %v31
    %833 = vmatprep.subr.mxu0 0.0
    %834 = vmatpush1.msra.mxu0 %v32
    %835 = vmatprep.subr.mxu0 0.0
    %836 = vmatpush1.msra.mxu0 %v33
    %837 = vmatprep.subr.mxu0 0.0
    %838 = vmatpush1.msra.mxu0 %v34
    %839 = vmatprep.subr.mxu0 0.0
    %840 = vmatpush1.msra.mxu0 0.0
    %841 = vmatprep.subr.mxu0 0.0
    %842 = vmatpush1.msra.mxu0 0.0
    %843 = vmatprep.subr.mxu0 0.0
    %844 = vmatpush1.msra.mxu0 0.0
    %845 = vmatprep.subr.mxu0 0.0
    %846 = vmatpush1.msra.mxu0 0.0
    %847 = vmatprep.subr.mxu0 0.0
    %848 = vmatpush1.msra.mxu0 0.0
    %849 = vmatprep.subr.mxu0 0.0
    %850 = vmatpush1.msra.mxu0 0.0
    %851 = vmatprep.subr.mxu0 0.0
    %852 = vmatpush1.msra.mxu0 0.0
    %853 = vmatprep.subr.mxu0 0.0
    %854 = vmatpush1.msra.mxu0 0.0
    %855 = vmatprep.subr.mxu0 0.0
    %856 = vmatpush1.msra.mxu0 0.0
    %857 = vmatprep.subr.mxu0 0.0
    %858 = vmatpush1.msra.mxu0 0.0
    %859 = vmatprep.subr.mxu0 0.0
    %860 = vmatpush1.msra.mxu0 0.0
    %861 = vmatprep.subr.mxu0 0.0
    %862 = vmatpush1.msra.mxu0 0.0
    %863 = vmatprep.subr.mxu0 0.0
    %864 = vmatpush1.msra.mxu0 0.0
    %865 = vmatprep.subr.mxu0 0.0
    %866 = vmatpush1.msra.mxu0 0.0
    %867 = vmatprep.subr.mxu0 0.0
    %868 = vmatpush1.msra.mxu0 0.0
    %869 = vmatprep.subr.mxu0 0.0
    %870 = vmatpush1.msra.mxu0 0.0
    %871 = vmatprep.subr.mxu0 0.0
    %872 = vmatpush1.msra.mxu0 0.0
    %873 = vmatprep.subr.mxu0 0.0
    %874 = vmatpush1.msra.mxu0 0.0
    %875 = vmatprep.subr.mxu0 0.0
    %876 = vmatpush1.msra.mxu0 0.0
    %877 = vmatprep.subr.mxu0 0.0
    %878 = vmatpush1.msra.mxu0 0.0
    %879 = vmatprep.subr.mxu0 0.0
    %880 = vmatpush1.msra.mxu0 0.0
    %881 = vmatprep.subr.mxu0 0.0
    %882 = vmatpush1.msra.mxu0 0.0
    %883 = vmatprep.subr.mxu0 0.0
    %884 = vmatpush1.msra.mxu0 0.0
    %885 = vmatprep.subr.mxu0 0.0
    %886 = vmatpush1.msra.mxu0 0.0
    %887 = vmatprep.subr.mxu0 0.0
    %888 = vmatpush1.msra.mxu0 0.0
    %889 = vmatprep.subr.mxu0 0.0
    %890 = vmatpush1.msra.mxu0 0.0
    %891 = vmatprep.subr.mxu0 0.0
    %892 = vmatpush1.msra.mxu0 0.0
    %893 = vmatprep.subr.mxu0 0.0
    %894 = vmatpush1.msra.mxu0 0.0
    %895 = vmatprep.mubr.f32.mxu0 0.0
    %896 = vmatmul.mubr.f32.gmra.mrb[0].mxu0 %v759
    %v897 = vpop.f32.mrb[0].mxu0
    %v898 = vadd.f32 0.0, %v897
    %v899 = vpop.f32.mrb[0].mxu0
    %900 = vdwg.mxu0
    %v901 = vld [vmem:[%s741 + $0x1] sm:$0xff]
    %v902 = vld [vmem:[%s741 + $0x9] sm:$0xff]
    %v903 = vsel %vm53, %v901, 0.0
    %904 = vadd.xlane.f32.xlu0 %v903
    %v905 = vpop.xlane.xlu0 %904
    %v906 = vsel %vm53, %v902, 0.0
    %907 = vadd.xlane.f32.xlu0 %v906
    %v908 = vpop.xlane.xlu0 %907
    %v909 = vmul.f32 %v905, %v40
    %v910 = vmul.f32 %v908, %v40
    %v911 = vsub.f32 %v901, %v909
    %v912 = vsub.f32 %v902, %v910
    %v913 = vmul.f32 %v911, %v911
    %v914 = vmul.f32 %v912, %v912
    %v915 = vsel %vm53, %v913, 0.0
    %916 = vadd.xlane.f32.xlu0 %v915
    %v917 = vpop.xlane.xlu0 %916
    %v918 = vsel %vm53, %v914, 0.0
    %919 = vadd.xlane.f32.xlu0 %v918
    %v920 = vpop.xlane.xlu0 %919
    %v921 = vmul.f32 %v917, %v40
    %v922 = vmul.f32 %v920, %v40
    %v923 = vadd.f32 %v921, 1e-05
    %v924 = vadd.f32 %v922, 1e-05
    %v925 = vrsqrt.pop %v923
    %v926 = vrsqrt.pop %v924
    %v927 = vmul.f32 %v911, %v925
    %v928 = vmul.f32 %v912, %v926
    %v929 = vmul.f32 %v927, %v229
    %v930 = vmul.f32 %v928, %v229
    %v931 = vadd.f32 %v929, %v237
    %v932 = vadd.f32 %v930, %v237
    %v933 = vlaneseq
    %v934 = vshrl.u32 %v933, 7
    %v935 = vsub.s32 0, %v934
    %v936 = vrot.slane %v828, %v935
    %v937 = vmul.f32 %v931, %v936
    %v938 = vmul.f32 %v932, %v936
    %v939 = vsel %vm53, %v937, 0.0
    %940 = vadd.xlane.f32.xlu0 %v939
    %v941 = vpop.xlane.xlu0 %940
    %v942 = vsel %vm53, %v938, 0.0
    %943 = vadd.xlane.f32.xlu0 %v942
    %v944 = vpop.xlane.xlu0 %943
    %v945 = vxor.u32 %v941, 2147483648
    %v946 = vxor.u32 %v944, 2147483648
    %v947 = vmul.f32 %v945, 1.442695
    %v948 = vpow.pop %v947
    %v949 = vmul.f32 %v946, 1.442695
    %v950 = vpow.pop %v949
    %v951 = vadd.f32 %v948, 1.0
    %v952 = vadd.f32 %v950, 1.0
    %v953 = vrcp.pop %v951
    %v954 = vmul.f32 1.0, %v953
    %v955 = vrcp.pop %v952
    %v956 = vmul.f32 1.0, %v955
    %v957 = vlaneseq
    %v958 = vshrl.u32 %v957, 7
    %v959 = vsub.s32 0, %v958
    %v960 = vrot.slane %v898, %v959
    %v961 = vmul.f32 %v954, %v960
    %v962 = vmul.f32 %v956, %v960
    %v963 = vadd.f32 %v961, %v275
    %v964 = vadd.f32 %v962, %v275
    %v965 = vadd.f32 %v963, %v901
    %v966 = vadd.f32 %v964, %v902
    %s967 = scalar_lea.vmem [#allocation2], 48
    %968 = vst.msk [vmem:[%s967] sm:$0xff] %vm53, %v965
    %969 = vst.msk [vmem:[%s967 + $0x8] sm:$0xff] %vm53, %v966
    %s970 = scalar_lea.vmem %s0, 96
    %v971 = vld [vmem:[%s970] sm:$0x1]
    %v972 = vsel %vm36, %v971, 0.0
    %973 = vadd.xlane.f32.xlu0 %v972
    %v974 = vpop.xlane.xlu0 %973
    %v975 = vmul.f32 %v974, %v40
    %v976 = vsub.f32 %v971, %v975
    %v977 = vmul.f32 %v976, %v976
    %v978 = vsel %vm36, %v977, 0.0
    %979 = vadd.xlane.f32.xlu0 %v978
    %v980 = vpop.xlane.xlu0 %979
    %v981 = vmul.f32 %v980, %v40
    %v982 = vadd.f32 %v981, 1e-05
    %v983 = vrsqrt.pop %v982
    %v984 = vmul.f32 %v976, %v983
    %v985 = vmul.f32 %v984, %v24
    %v986 = vadd.f32 %v985, %v25
    %v988 = vsel %vm53, %v986, 0
    %990 = vmatprep.subr.mxu0 0.0
    %991 = vmatpush1.msra.mxu0 %v27
    %992 = vmatprep.subr.mxu0 0.0
    %993 = vmatpush1.msra.mxu0 %v28
    %994 = vmatprep.subr.mxu0 0.0
    %995 = vmatpush1.msra.mxu0 %v29
    %996 = vmatprep.subr.mxu0 0.0
    %997 = vmatpush1.msra.mxu0 %v30
    %998 = vmatprep.subr.mxu0 0.0
    %999 = vmatpush1.msra.mxu0 0.0
    %1000 = vmatprep.subr.mxu0 0.0
    %1001 = vmatpush1.msra.mxu0 0.0
    %1002 = vmatprep.subr.mxu0 0.0
    %1003 = vmatpush1.msra.mxu0 0.0
    %1004 = vmatprep.subr.mxu0 0.0
    %1005 = vmatpush1.msra.mxu0 0.0
    %1006 = vmatprep.subr.mxu0 0.0
    %1007 = vmatpush1.msra.mxu0 0.0
    %1008 = vmatprep.subr.mxu0 0.0
    %1009 = vmatpush1.msra.mxu0 0.0
    %1010 = vmatprep.subr.mxu0 0.0
    %1011 = vmatpush1.msra.mxu0 0.0
    %1012 = vmatprep.subr.mxu0 0.0
    %1013 = vmatpush1.msra.mxu0 0.0
    %1014 = vmatprep.subr.mxu0 0.0
    %1015 = vmatpush1.msra.mxu0 0.0
    %1016 = vmatprep.subr.mxu0 0.0
    %1017 = vmatpush1.msra.mxu0 0.0
    %1018 = vmatprep.subr.mxu0 0.0
    %1019 = vmatpush1.msra.mxu0 0.0
    %1020 = vmatprep.subr.mxu0 0.0
    %1021 = vmatpush1.msra.mxu0 0.0
    %1022 = vmatprep.subr.mxu0 0.0
    %1023 = vmatpush1.msra.mxu0 0.0
    %1024 = vmatprep.subr.mxu0 0.0
    %1025 = vmatpush1.msra.mxu0 0.0
    %1026 = vmatprep.subr.mxu0 0.0
    %1027 = vmatpush1.msra.mxu0 0.0
    %1028 = vmatprep.subr.mxu0 0.0
    %1029 = vmatpush1.msra.mxu0 0.0
    %1030 = vmatprep.subr.mxu0 0.0
    %1031 = vmatpush1.msra.mxu0 0.0
    %1032 = vmatprep.subr.mxu0 0.0
    %1033 = vmatpush1.msra.mxu0 0.0
    %1034 = vmatprep.subr.mxu0 0.0
    %1035 = vmatpush1.msra.mxu0 0.0
    %1036 = vmatprep.subr.mxu0 0.0
    %1037 = vmatpush1.msra.mxu0 0.0
    %1038 = vmatprep.subr.mxu0 0.0
    %1039 = vmatpush1.msra.mxu0 0.0
    %1040 = vmatprep.subr.mxu0 0.0
    %1041 = vmatpush1.msra.mxu0 0.0
    %1042 = vmatprep.subr.mxu0 0.0
    %1043 = vmatpush1.msra.mxu0 0.0
    %1044 = vmatprep.subr.mxu0 0.0
    %1045 = vmatpush1.msra.mxu0 0.0
    %1046 = vmatprep.subr.mxu0 0.0
    %1047 = vmatpush1.msra.mxu0 0.0
    %1048 = vmatprep.subr.mxu0 0.0
    %1049 = vmatpush1.msra.mxu0 0.0
    %1050 = vmatprep.subr.mxu0 0.0
    %1051 = vmatpush1.msra.mxu0 0.0
    %1052 = vmatprep.subr.mxu0 0.0
    %1053 = vmatpush1.msra.mxu0 0.0
    %1054 = vmatprep.mubr.f32.mxu0 0.0
    %1055 = vmatmul.mubr.f32.gmra.mrb[0].mxu0 %v988
    %v1056 = vpop.f32.mrb[0].mxu0
    %v1057 = vadd.f32 0.0, %v1056
    %v1058 = vpop.f32.mrb[0].mxu0
    %1059 = vdwg.mxu0
    %1060 = vmatprep.subr.mxu0 0.0
    %1061 = vmatpush1.msra.mxu0 %v31
    %1062 = vmatprep.subr.mxu0 0.0
    %1063 = vmatpush1.msra.mxu0 %v32
    %1064 = vmatprep.subr.mxu0 0.0
    %1065 = vmatpush1.msra.mxu0 %v33
    %1066 = vmatprep.subr.mxu0 0.0
    %1067 = vmatpush1.msra.mxu0 %v34
    %1068 = vmatprep.subr.mxu0 0.0
    %1069 = vmatpush1.msra.mxu0 0.0
    %1070 = vmatprep.subr.mxu0 0.0
    %1071 = vmatpush1.msra.mxu0 0.0
    %1072 = vmatprep.subr.mxu0 0.0
    %1073 = vmatpush1.msra.mxu0 0.0
    %1074 = vmatprep.subr.mxu0 0.0
    %1075 = vmatpush1.msra.mxu0 0.0
    %1076 = vmatprep.subr.mxu0 0.0
    %1077 = vmatpush1.msra.mxu0 0.0
    %1078 = vmatprep.subr.mxu0 0.0
    %1079 = vmatpush1.msra.mxu0 0.0
    %1080 = vmatprep.subr.mxu0 0.0
    %1081 = vmatpush1.msra.mxu0 0.0
    %1082 = vmatprep.subr.mxu0 0.0
    %1083 = vmatpush1.msra.mxu0 0.0
    %1084 = vmatprep.subr.mxu0 0.0
    %1085 = vmatpush1.msra.mxu0 0.0
    %1086 = vmatprep.subr.mxu0 0.0
    %1087 = vmatpush1.msra.mxu0 0.0
    %1088 = vmatprep.subr.mxu0 0.0
    %1089 = vmatpush1.msra.mxu0 0.0
    %1090 = vmatprep.subr.mxu0 0.0
    %1091 = vmatpush1.msra.mxu0 0.0
    %1092 = vmatprep.subr.mxu0 0.0
    %1093 = vmatpush1.msra.mxu0 0.0
    %1094 = vmatprep.subr.mxu0 0.0
    %1095 = vmatpush1.msra.mxu0 0.0
    %1096 = vmatprep.subr.mxu0 0.0
    %1097 = vmatpush1.msra.mxu0 0.0
    %1098 = vmatprep.subr.mxu0 0.0
    %1099 = vmatpush1.msra.mxu0 0.0
    %1100 = vmatprep.subr.mxu0 0.0
    %1101 = vmatpush1.msra.mxu0 0.0
    %1102 = vmatprep.subr.mxu0 0.0
    %1103 = vmatpush1.msra.mxu0 0.0
    %1104 = vmatprep.subr.mxu0 0.0
    %1105 = vmatpush1.msra.mxu0 0.0
    %1106 = vmatprep.subr.mxu0 0.0
    %1107 = vmatpush1.msra.mxu0 0.0
    %1108 = vmatprep.subr.mxu0 0.0
    %1109 = vmatpush1.msra.mxu0 0.0
    %1110 = vmatprep.subr.mxu0 0.0
    %1111 = vmatpush1.msra.mxu0 0.0
    %1112 = vmatprep.subr.mxu0 0.0
    %1113 = vmatpush1.msra.mxu0 0.0
    %1114 = vmatprep.subr.mxu0 0.0
    %1115 = vmatpush1.msra.mxu0 0.0
    %1116 = vmatprep.subr.mxu0 0.0
    %1117 = vmatpush1.msra.mxu0 0.0
    %1118 = vmatprep.subr.mxu0 0.0
    %1119 = vmatpush1.msra.mxu0 0.0
    %1120 = vmatprep.subr.mxu0 0.0
    %1121 = vmatpush1.msra.mxu0 0.0
    %1122 = vmatprep.subr.mxu0 0.0
    %1123 = vmatpush1.msra.mxu0 0.0
    %1124 = vmatprep.mubr.f32.mxu0 0.0
    %1125 = vmatmul.mubr.f32.gmra.mrb[0].mxu0 %v988
    %v1126 = vpop.f32.mrb[0].mxu0
    %v1127 = vadd.f32 0.0, %v1126
    %v1128 = vpop.f32.mrb[0].mxu0
    %1129 = vdwg.mxu0
    %v1130 = vld [vmem:[%s970 + $0x1] sm:$0xff]
    %v1131 = vld [vmem:[%s970 + $0x9] sm:$0xff]
    %v1132 = vsel %vm53, %v1130, 0.0
    %1133 = vadd.xlane.f32.xlu0 %v1132
    %v1134 = vpop.xlane.xlu0 %1133
    %v1135 = vsel %vm53, %v1131, 0.0
    %1136 = vadd.xlane.f32.xlu0 %v1135
    %v1137 = vpop.xlane.xlu0 %1136
    %v1138 = vmul.f32 %v1134, %v40
    %v1139 = vmul.f32 %v1137, %v40
    %v1140 = vsub.f32 %v1130, %v1138
    %v1141 = vsub.f32 %v1131, %v1139
    %v1142 = vmul.f32 %v1140, %v1140
    %v1143 = vmul.f32 %v1141, %v1141
    %v1144 = vsel %vm53, %v1142, 0.0
    %1145 = vadd.xlane.f32.xlu0 %v1144
    %v1146 = vpop.xlane.xlu0 %1145
    %v1147 = vsel %vm53, %v1143, 0.0
    %1148 = vadd.xlane.f32.xlu0 %v1147
    %v1149 = vpop.xlane.xlu0 %1148
    %v1150 = vmul.f32 %v1146, %v40
    %v1151 = vmul.f32 %v1149, %v40
    %v1152 = vadd.f32 %v1150, 1e-05
    %v1153 = vadd.f32 %v1151, 1e-05
    %v1154 = vrsqrt.pop %v1152
    %v1155 = vrsqrt.pop %v1153
    %v1156 = vmul.f32 %v1140, %v1154
    %v1157 = vmul.f32 %v1141, %v1155
    %v1158 = vmul.f32 %v1156, %v229
    %v1159 = vmul.f32 %v1157, %v229
    %v1160 = vadd.f32 %v1158, %v237
    %v1161 = vadd.f32 %v1159, %v237
    %v1162 = vlaneseq
    %v1163 = vshrl.u32 %v1162, 7
    %v1164 = vsub.s32 0, %v1163
    %v1165 = vrot.slane %v1057, %v1164
    %v1166 = vmul.f32 %v1160, %v1165
    %v1167 = vmul.f32 %v1161, %v1165
    %v1168 = vsel %vm53, %v1166, 0.0
    %1169 = vadd.xlane.f32.xlu0 %v1168
    %v1170 = vpop.xlane.xlu0 %1169
    %v1171 = vsel %vm53, %v1167, 0.0
    %1172 = vadd.xlane.f32.xlu0 %v1171
    %v1173 = vpop.xlane.xlu0 %1172
    %v1174 = vxor.u32 %v1170, 2147483648
    %v1175 = vxor.u32 %v1173, 2147483648
    %v1176 = vmul.f32 %v1174, 1.442695
    %v1177 = vpow.pop %v1176
    %v1178 = vmul.f32 %v1175, 1.442695
    %v1179 = vpow.pop %v1178
    %v1180 = vadd.f32 %v1177, 1.0
    %v1181 = vadd.f32 %v1179, 1.0
    %v1182 = vrcp.pop %v1180
    %v1183 = vmul.f32 1.0, %v1182
    %v1184 = vrcp.pop %v1181
    %v1185 = vmul.f32 1.0, %v1184
    %v1186 = vlaneseq
    %v1187 = vshrl.u32 %v1186, 7
    %v1188 = vsub.s32 0, %v1187
    %v1189 = vrot.slane %v1127, %v1188
    %v1190 = vmul.f32 %v1183, %v1189
    %v1191 = vmul.f32 %v1185, %v1189
    %v1192 = vadd.f32 %v1190, %v275
    %v1193 = vadd.f32 %v1191, %v275
    %v1194 = vadd.f32 %v1192, %v1130
    %v1195 = vadd.f32 %v1193, %v1131
    %s1196 = scalar_lea.vmem [#allocation2], 64
    %1197 = vst.msk [vmem:[%s1196] sm:$0xff] %vm53, %v1194
    %1198 = vst.msk [vmem:[%s1196 + $0x8] sm:$0xff] %vm53, %v1195
    %s1199 = scalar_lea.vmem %s0, 120
    %v1200 = vld [vmem:[%s1199] sm:$0x1]
    %v1201 = vsel %vm36, %v1200, 0.0
    %1202 = vadd.xlane.f32.xlu0 %v1201
    %v1203 = vpop.xlane.xlu0 %1202
    %v1204 = vmul.f32 %v1203, %v40
    %v1205 = vsub.f32 %v1200, %v1204
    %v1206 = vmul.f32 %v1205, %v1205
    %v1207 = vsel %vm36, %v1206, 0.0
    %1208 = vadd.xlane.f32.xlu0 %v1207
    %v1209 = vpop.xlane.xlu0 %1208
    %v1210 = vmul.f32 %v1209, %v40
    %v1211 = vadd.f32 %v1210, 1e-05
    %v1212 = vrsqrt.pop %v1211
    %v1213 = vmul.f32 %v1205, %v1212
    %v1214 = vmul.f32 %v1213, %v24
    %v1215 = vadd.f32 %v1214, %v25
    %v1217 = vsel %vm53, %v1215, 0
    %1219 = vmatprep.subr.mxu0 0.0
    %1220 = vmatpush1.msra.mxu0 %v27
    %1221 = vmatprep.subr.mxu0 0.0
    %1222 = vmatpush1.msra.mxu0 %v28
    %1223 = vmatprep.subr.mxu0 0.0
    %1224 = vmatpush1.msra.mxu0 %v29
    %1225 = vmatprep.subr.mxu0 0.0
    %1226 = vmatpush1.msra.mxu0 %v30
    %1227 = vmatprep.subr.mxu0 0.0
    %1228 = vmatpush1.msra.mxu0 0.0
    %1229 = vmatprep.subr.mxu0 0.0
    %1230 = vmatpush1.msra.mxu0 0.0
    %1231 = vmatprep.subr.mxu0 0.0
    %1232 = vmatpush1.msra.mxu0 0.0
    %1233 = vmatprep.subr.mxu0 0.0
    %1234 = vmatpush1.msra.mxu0 0.0
    %1235 = vmatprep.subr.mxu0 0.0
    %1236 = vmatpush1.msra.mxu0 0.0
    %1237 = vmatprep.subr.mxu0 0.0
    %1238 = vmatpush1.msra.mxu0 0.0
    %1239 = vmatprep.subr.mxu0 0.0
    %1240 = vmatpush1.msra.mxu0 0.0
    %1241 = vmatprep.subr.mxu0 0.0
    %1242 = vmatpush1.msra.mxu0 0.0
    %1243 = vmatprep.subr.mxu0 0.0
    %1244 = vmatpush1.msra.mxu0 0.0
    %1245 = vmatprep.subr.mxu0 0.0
    %1246 = vmatpush1.msra.mxu0 0.0
    %1247 = vmatprep.subr.mxu0 0.0
    %1248 = vmatpush1.msra.mxu0 0.0
    %1249 = vmatprep.subr.mxu0 0.0
    %1250 = vmatpush1.msra.mxu0 0.0
    %1251 = vmatprep.subr.mxu0 0.0
    %1252 = vmatpush1.msra.mxu0 0.0
    %1253 = vmatprep.subr.mxu0 0.0
    %1254 = vmatpush1.msra.mxu0 0.0
    %1255 = vmatprep.subr.mxu0 0.0
    %1256 = vmatpush1.msra.mxu0 0.0
    %1257 = vmatprep.subr.mxu0 0.0
    %1258 = vmatpush1.msra.mxu0 0.0
    %1259 = vmatprep.subr.mxu0 0.0
    %1260 = vmatpush1.msra.mxu0 0.0
    %1261 = vmatprep.subr.mxu0 0.0
    %1262 = vmatpush1.msra.mxu0 0.0
    %1263 = vmatprep.subr.mxu0 0.0
    %1264 = vmatpush1.msra.mxu0 0.0
    %1265 = vmatprep.subr.mxu0 0.0
    %1266 = vmatpush1.msra.mxu0 0.0
    %1267 = vmatprep.subr.mxu0 0.0
    %1268 = vmatpush1.msra.mxu0 0.0
    %1269 = vmatprep.subr.mxu0 0.0
    %1270 = vmatpush1.msra.mxu0 0.0
    %1271 = vmatprep.subr.mxu0 0.0
    %1272 = vmatpush1.msra.mxu0 0.0
    %1273 = vmatprep.subr.mxu0 0.0
    %1274 = vmatpush1.msra.mxu0 0.0
    %1275 = vmatprep.subr.mxu0 0.0
    %1276 = vmatpush1.msra.mxu0 0.0
    %1277 = vmatprep.subr.mxu0 0.0
    %1278 = vmatpush1.msra.mxu0 0.0
    %1279 = vmatprep.subr.mxu0 0.0
    %1280 = vmatpush1.msra.mxu0 0.0
    %1281 = vmatprep.subr.mxu0 0.0
    %1282 = vmatpush1.msra.mxu0 0.0
    %1283 = vmatprep.mubr.f32.mxu0 0.0
    %1284 = vmatmul.mubr.f32.gmra.mrb[0].mxu0 %v1217
    %v1285 = vpop.f32.mrb[0].mxu0
    %v1286 = vadd.f32 0.0, %v1285
    %v1287 = vpop.f32.mrb[0].mxu0
    %1288 = vdwg.mxu0
    %1289 = vmatprep.subr.mxu0 0.0
    %1290 = vmatpush1.msra.mxu0 %v31
    %1291 = vmatprep.subr.mxu0 0.0
    %1292 = vmatpush1.msra.mxu0 %v32
    %1293 = vmatprep.subr.mxu0 0.0
    %1294 = vmatpush1.msra.mxu0 %v33
    %1295 = vmatprep.subr.mxu0 0.0
    %1296 = vmatpush1.msra.mxu0 %v34
    %1297 = vmatprep.subr.mxu0 0.0
    %1298 = vmatpush1.msra.mxu0 0.0
    %1299 = vmatprep.subr.mxu0 0.0
    %1300 = vmatpush1.msra.mxu0 0.0
    %1301 = vmatprep.subr.mxu0 0.0
    %1302 = vmatpush1.msra.mxu0 0.0
    %1303 = vmatprep.subr.mxu0 0.0
    %1304 = vmatpush1.msra.mxu0 0.0
    %1305 = vmatprep.subr.mxu0 0.0
    %1306 = vmatpush1.msra.mxu0 0.0
    %1307 = vmatprep.subr.mxu0 0.0
    %1308 = vmatpush1.msra.mxu0 0.0
    %1309 = vmatprep.subr.mxu0 0.0
    %1310 = vmatpush1.msra.mxu0 0.0
    %1311 = vmatprep.subr.mxu0 0.0
    %1312 = vmatpush1.msra.mxu0 0.0
    %1313 = vmatprep.subr.mxu0 0.0
    %1314 = vmatpush1.msra.mxu0 0.0
    %1315 = vmatprep.subr.mxu0 0.0
    %1316 = vmatpush1.msra.mxu0 0.0
    %1317 = vmatprep.subr.mxu0 0.0
    %1318 = vmatpush1.msra.mxu0 0.0
    %1319 = vmatprep.subr.mxu0 0.0
    %1320 = vmatpush1.msra.mxu0 0.0
    %1321 = vmatprep.subr.mxu0 0.0
    %1322 = vmatpush1.msra.mxu0 0.0
    %1323 = vmatprep.subr.mxu0 0.0
    %1324 = vmatpush1.msra.mxu0 0.0
    %1325 = vmatprep.subr.mxu0 0.0
    %1326 = vmatpush1.msra.mxu0 0.0
    %1327 = vmatprep.subr.mxu0 0.0
    %1328 = vmatpush1.msra.mxu0 0.0
    %1329 = vmatprep.subr.mxu0 0.0
    %1330 = vmatpush1.msra.mxu0 0.0
    %1331 = vmatprep.subr.mxu0 0.0
    %1332 = vmatpush1.msra.mxu0 0.0
    %1333 = vmatprep.subr.mxu0 0.0
    %1334 = vmatpush1.msra.mxu0 0.0
    %1335 = vmatprep.subr.mxu0 0.0
    %1336 = vmatpush1.msra.mxu0 0.0
    %1337 = vmatprep.subr.mxu0 0.0
    %1338 = vmatpush1.msra.mxu0 0.0
    %1339 = vmatprep.subr.mxu0 0.0
    %1340 = vmatpush1.msra.mxu0 0.0
    %1341 = vmatprep.subr.mxu0 0.0
    %1342 = vmatpush1.msra.mxu0 0.0
    %1343 = vmatprep.subr.mxu0 0.0
    %1344 = vmatpush1.msra.mxu0 0.0
    %1345 = vmatprep.subr.mxu0 0.0
    %1346 = vmatpush1.msra.mxu0 0.0
    %1347 = vmatprep.subr.mxu0 0.0
    %1348 = vmatpush1.msra.mxu0 0.0
    %1349 = vmatprep.subr.mxu0 0.0
    %1350 = vmatpush1.msra.mxu0 0.0
    %1351 = vmatprep.subr.mxu0 0.0
    %1352 = vmatpush1.msra.mxu0 0.0
    %1353 = vmatprep.mubr.f32.mxu0 0.0
    %1354 = vmatmul.mubr.f32.gmra.mrb[0].mxu0 %v1217
    %v1355 = vpop.f32.mrb[0].mxu0
    %v1356 = vadd.f32 0.0, %v1355
    %v1357 = vpop.f32.mrb[0].mxu0
    %1358 = vdwg.mxu0
    %v1359 = vld [vmem:[%s1199 + $0x1] sm:$0xff]
    %v1360 = vld [vmem:[%s1199 + $0x9] sm:$0xff]
    %v1361 = vsel %vm53, %v1359, 0.0
    %1362 = vadd.xlane.f32.xlu0 %v1361
    %v1363 = vpop.xlane.xlu0 %1362
    %v1364 = vsel %vm53, %v1360, 0.0
    %1365 = vadd.xlane.f32.xlu0 %v1364
    %v1366 = vpop.xlane.xlu0 %1365
    %v1367 = vmul.f32 %v1363, %v40
    %v1368 = vmul.f32 %v1366, %v40
    %v1369 = vsub.f32 %v1359, %v1367
    %v1370 = vsub.f32 %v1360, %v1368
    %v1371 = vmul.f32 %v1369, %v1369
    %v1372 = vmul.f32 %v1370, %v1370
    %v1373 = vsel %vm53, %v1371, 0.0
    %1374 = vadd.xlane.f32.xlu0 %v1373
    %v1375 = vpop.xlane.xlu0 %1374
    %v1376 = vsel %vm53, %v1372, 0.0
    %1377 = vadd.xlane.f32.xlu0 %v1376
    %v1378 = vpop.xlane.xlu0 %1377
    %v1379 = vmul.f32 %v1375, %v40
    %v1380 = vmul.f32 %v1378, %v40
    %v1381 = vadd.f32 %v1379, 1e-05
    %v1382 = vadd.f32 %v1380, 1e-05
    %v1383 = vrsqrt.pop %v1381
    %v1384 = vrsqrt.pop %v1382
    %v1385 = vmul.f32 %v1369, %v1383
    %v1386 = vmul.f32 %v1370, %v1384
    %v1387 = vmul.f32 %v1385, %v229
    %v1388 = vmul.f32 %v1386, %v229
    %v1389 = vadd.f32 %v1387, %v237
    %v1390 = vadd.f32 %v1388, %v237
    %v1391 = vlaneseq
    %v1392 = vshrl.u32 %v1391, 7
    %v1393 = vsub.s32 0, %v1392
    %v1394 = vrot.slane %v1286, %v1393
    %v1395 = vmul.f32 %v1389, %v1394
    %v1396 = vmul.f32 %v1390, %v1394
    %v1397 = vsel %vm53, %v1395, 0.0
    %1398 = vadd.xlane.f32.xlu0 %v1397
    %v1399 = vpop.xlane.xlu0 %1398
    %v1400 = vsel %vm53, %v1396, 0.0
    %1401 = vadd.xlane.f32.xlu0 %v1400
    %v1402 = vpop.xlane.xlu0 %1401
    %v1403 = vxor.u32 %v1399, 2147483648
    %v1404 = vxor.u32 %v1402, 2147483648
    %v1405 = vmul.f32 %v1403, 1.442695
    %v1406 = vpow.pop %v1405
    %v1407 = vmul.f32 %v1404, 1.442695
    %v1408 = vpow.pop %v1407
    %v1409 = vadd.f32 %v1406, 1.0
    %v1410 = vadd.f32 %v1408, 1.0
    %v1411 = vrcp.pop %v1409
    %v1412 = vmul.f32 1.0, %v1411
    %v1413 = vrcp.pop %v1410
    %v1414 = vmul.f32 1.0, %v1413
    %v1415 = vlaneseq
    %v1416 = vshrl.u32 %v1415, 7
    %v1417 = vsub.s32 0, %v1416
    %v1418 = vrot.slane %v1356, %v1417
    %v1419 = vmul.f32 %v1412, %v1418
    %v1420 = vmul.f32 %v1414, %v1418
    %v1421 = vadd.f32 %v1419, %v275
    %v1422 = vadd.f32 %v1420, %v275
    %v1423 = vadd.f32 %v1421, %v1359
    %v1424 = vadd.f32 %v1422, %v1360
    %s1425 = scalar_lea.vmem [#allocation2], 80
    %1426 = vst.msk [vmem:[%s1425] sm:$0xff] %vm53, %v1423
    %1427 = vst.msk [vmem:[%s1425 + $0x8] sm:$0xff] %vm53, %v1424
    %s1428 = scalar_lea.vmem %s0, 144
    %v1429 = vld [vmem:[%s1428] sm:$0x1]
    %v1430 = vsel %vm36, %v1429, 0.0
    %1431 = vadd.xlane.f32.xlu0 %v1430
    %v1432 = vpop.xlane.xlu0 %1431
    %v1433 = vmul.f32 %v1432, %v40
    %v1434 = vsub.f32 %v1429, %v1433
    %v1435 = vmul.f32 %v1434, %v1434
    %v1436 = vsel %vm36, %v1435, 0.0
    %1437 = vadd.xlane.f32.xlu0 %v1436
    %v1438 = vpop.xlane.xlu0 %1437
    %v1439 = vmul.f32 %v1438, %v40
    %v1440 = vadd.f32 %v1439, 1e-05
    %v1441 = vrsqrt.pop %v1440
    %v1442 = vmul.f32 %v1434, %v1441
    %v1443 = vmul.f32 %v1442, %v24
    %v1444 = vadd.f32 %v1443, %v25
    %v1446 = vsel %vm53, %v1444, 0
    %1448 = vmatprep.subr.mxu0 0.0
    %1449 = vmatpush1.msra.mxu0 %v27
    %1450 = vmatprep.subr.mxu0 0.0
    %1451 = vmatpush1.msra.mxu0 %v28
    %1452 = vmatprep.subr.mxu0 0.0
    %1453 = vmatpush1.msra.mxu0 %v29
    %1454 = vmatprep.subr.mxu0 0.0
    %1455 = vmatpush1.msra.mxu0 %v30
    %1456 = vmatprep.subr.mxu0 0.0
    %1457 = vmatpush1.msra.mxu0 0.0
    %1458 = vmatprep.subr.mxu0 0.0
    %1459 = vmatpush1.msra.mxu0 0.0
    %1460 = vmatprep.subr.mxu0 0.0
    %1461 = vmatpush1.msra.mxu0 0.0
    %1462 = vmatprep.subr.mxu0 0.0
    %1463 = vmatpush1.msra.mxu0 0.0
    %1464 = vmatprep.subr.mxu0 0.0
    %1465 = vmatpush1.msra.mxu0 0.0
    %1466 = vmatprep.subr.mxu0 0.0
    %1467 = vmatpush1.msra.mxu0 0.0
    %1468 = vmatprep.subr.mxu0 0.0
    %1469 = vmatpush1.msra.mxu0 0.0
    %1470 = vmatprep.subr.mxu0 0.0
    %1471 = vmatpush1.msra.mxu0 0.0
    %1472 = vmatprep.subr.mxu0 0.0
    %1473 = vmatpush1.msra.mxu0 0.0
    %1474 = vmatprep.subr.mxu0 0.0
    %1475 = vmatpush1.msra.mxu0 0.0
    %1476 = vmatprep.subr.mxu0 0.0
    %1477 = vmatpush1.msra.mxu0 0.0
    %1478 = vmatprep.subr.mxu0 0.0
    %1479 = vmatpush1.msra.mxu0 0.0
    %1480 = vmatprep.subr.mxu0 0.0
    %1481 = vmatpush1.msra.mxu0 0.0
    %1482 = vmatprep.subr.mxu0 0.0
    %1483 = vmatpush1.msra.mxu0 0.0
    %1484 = vmatprep.subr.mxu0 0.0
    %1485 = vmatpush1.msra.mxu0 0.0
    %1486 = vmatprep.subr.mxu0 0.0
    %1487 = vmatpush1.msra.mxu0 0.0
    %1488 = vmatprep.subr.mxu0 0.0
    %1489 = vmatpush1.msra.mxu0 0.0
    %1490 = vmatprep.subr.mxu0 0.0
    %1491 = vmatpush1.msra.mxu0 0.0
    %1492 = vmatprep.subr.mxu0 0.0
    %1493 = vmatpush1.msra.mxu0 0.0
    %1494 = vmatprep.subr.mxu0 0.0
    %1495 = vmatpush1.msra.mxu0 0.0
    %1496 = vmatprep.subr.mxu0 0.0
    %1497 = vmatpush1.msra.mxu0 0.0
    %1498 = vmatprep.subr.mxu0 0.0
    %1499 = vmatpush1.msra.mxu0 0.0
    %1500 = vmatprep.subr.mxu0 0.0
    %1501 = vmatpush1.msra.mxu0 0.0
    %1502 = vmatprep.subr.mxu0 0.0
    %1503 = vmatpush1.msra.mxu0 0.0
    %1504 = vmatprep.subr.mxu0 0.0
    %1505 = vmatpush1.msra.mxu0 0.0
    %1506 = vmatprep.subr.mxu0 0.0
    %1507 = vmatpush1.msra.mxu0 0.0
    %1508 = vmatprep.subr.mxu0 0.0
    %1509 = vmatpush1.msra.mxu0 0.0
    %1510 = vmatprep.subr.mxu0 0.0
    %1511 = vmatpush1.msra.mxu0 0.0
    %1512 = vmatprep.mubr.f32.mxu0 0.0
    %1513 = vmatmul.mubr.f32.gmra.mrb[0].mxu0 %v1446
    %v1514 = vpop.f32.mrb[0].mxu0
    %v1515 = vadd.f32 0.0, %v1514
    %v1516 = vpop.f32.mrb[0].mxu0
    %1517 = vdwg.mxu0
    %1518 = vmatprep.subr.mxu0 0.0
    %1519 = vmatpush1.msra.mxu0 %v31
    %1520 = vmatprep.subr.mxu0 0.0
    %1521 = vmatpush1.msra.mxu0 %v32
    %1522 = vmatprep.subr.mxu0 0.0
    %1523 = vmatpush1.msra.mxu0 %v33
    %1524 = vmatprep.subr.mxu0 0.0
    %1525 = vmatpush1.msra.mxu0 %v34
    %1526 = vmatprep.subr.mxu0 0.0
    %1527 = vmatpush1.msra.mxu0 0.0
    %1528 = vmatprep.subr.mxu0 0.0
    %1529 = vmatpush1.msra.mxu0 0.0
    %1530 = vmatprep.subr.mxu0 0.0
    %1531 = vmatpush1.msra.mxu0 0.0
    %1532 = vmatprep.subr.mxu0 0.0
    %1533 = vmatpush1.msra.mxu0 0.0
    %1534 = vmatprep.subr.mxu0 0.0
    %1535 = vmatpush1.msra.mxu0 0.0
    %1536 = vmatprep.subr.mxu0 0.0
    %1537 = vmatpush1.msra.mxu0 0.0
    %1538 = vmatprep.subr.mxu0 0.0
    %1539 = vmatpush1.msra.mxu0 0.0
    %1540 = vmatprep.subr.mxu0 0.0
    %1541 = vmatpush1.msra.mxu0 0.0
    %1542 = vmatprep.subr.mxu0 0.0
    %1543 = vmatpush1.msra.mxu0 0.0
    %1544 = vmatprep.subr.mxu0 0.0
    %1545 = vmatpush1.msra.mxu0 0.0
    %1546 = vmatprep.subr.mxu0 0.0
    %1547 = vmatpush1.msra.mxu0 0.0
    %1548 = vmatprep.subr.mxu0 0.0
    %1549 = vmatpush1.msra.mxu0 0.0
    %1550 = vmatprep.subr.mxu0 0.0
    %1551 = vmatpush1.msra.mxu0 0.0
    %1552 = vmatprep.subr.mxu0 0.0
    %1553 = vmatpush1.msra.mxu0 0.0
    %1554 = vmatprep.subr.mxu0 0.0
    %1555 = vmatpush1.msra.mxu0 0.0
    %1556 = vmatprep.subr.mxu0 0.0
    %1557 = vmatpush1.msra.mxu0 0.0
    %1558 = vmatprep.subr.mxu0 0.0
    %1559 = vmatpush1.msra.mxu0 0.0
    %1560 = vmatprep.subr.mxu0 0.0
    %1561 = vmatpush1.msra.mxu0 0.0
    %1562 = vmatprep.subr.mxu0 0.0
    %1563 = vmatpush1.msra.mxu0 0.0
    %1564 = vmatprep.subr.mxu0 0.0
    %1565 = vmatpush1.msra.mxu0 0.0
    %1566 = vmatprep.subr.mxu0 0.0
    %1567 = vmatpush1.msra.mxu0 0.0
    %1568 = vmatprep.subr.mxu0 0.0
    %1569 = vmatpush1.msra.mxu0 0.0
    %1570 = vmatprep.subr.mxu0 0.0
    %1571 = vmatpush1.msra.mxu0 0.0
    %1572 = vmatprep.subr.mxu0 0.0
    %1573 = vmatpush1.msra.mxu0 0.0
    %1574 = vmatprep.subr.mxu0 0.0
    %1575 = vmatpush1.msra.mxu0 0.0
    %1576 = vmatprep.subr.mxu0 0.0
    %1577 = vmatpush1.msra.mxu0 0.0
    %1578 = vmatprep.subr.mxu0 0.0
    %1579 = vmatpush1.msra.mxu0 0.0
    %1580 = vmatprep.subr.mxu0 0.0
    %1581 = vmatpush1.msra.mxu0 0.0
    %1582 = vmatprep.mubr.f32.mxu0 0.0
    %1583 = vmatmul.mubr.f32.gmra.mrb[0].mxu0 %v1446
    %v1584 = vpop.f32.mrb[0].mxu0
    %v1585 = vadd.f32 0.0, %v1584
    %v1586 = vpop.f32.mrb[0].mxu0
    %1587 = vdwg.mxu0
    %v1588 = vld [vmem:[%s1428 + $0x1] sm:$0xff]
    %v1589 = vld [vmem:[%s1428 + $0x9] sm:$0xff]
    %v1590 = vsel %vm53, %v1588, 0.0
    %1591 = vadd.xlane.f32.xlu0 %v1590
    %v1592 = vpop.xlane.xlu0 %1591
    %v1593 = vsel %vm53, %v1589, 0.0
    %1594 = vadd.xlane.f32.xlu0 %v1593
    %v1595 = vpop.xlane.xlu0 %1594
    %v1596 = vmul.f32 %v1592, %v40
    %v1597 = vmul.f32 %v1595, %v40
    %v1598 = vsub.f32 %v1588, %v1596
    %v1599 = vsub.f32 %v1589, %v1597
    %v1600 = vmul.f32 %v1598, %v1598
    %v1601 = vmul.f32 %v1599, %v1599
    %v1602 = vsel %vm53, %v1600, 0.0
    %1603 = vadd.xlane.f32.xlu0 %v1602
    %v1604 = vpop.xlane.xlu0 %1603
    %v1605 = vsel %vm53, %v1601, 0.0
    %1606 = vadd.xlane.f32.xlu0 %v1605
    %v1607 = vpop.xlane.xlu0 %1606
    %v1608 = vmul.f32 %v1604, %v40
    %v1609 = vmul.f32 %v1607, %v40
    %v1610 = vadd.f32 %v1608, 1e-05
    %v1611 = vadd.f32 %v1609, 1e-05
    %v1612 = vrsqrt.pop %v1610
    %v1613 = vrsqrt.pop %v1611
    %v1614 = vmul.f32 %v1598, %v1612
    %v1615 = vmul.f32 %v1599, %v1613
    %v1616 = vmul.f32 %v1614, %v229
    %v1617 = vmul.f32 %v1615, %v229
    %v1618 = vadd.f32 %v1616, %v237
    %v1619 = vadd.f32 %v1617, %v237
    %v1620 = vlaneseq
    %v1621 = vshrl.u32 %v1620, 7
    %v1622 = vsub.s32 0, %v1621
    %v1623 = vrot.slane %v1515, %v1622
    %v1624 = vmul.f32 %v1618, %v1623
    %v1625 = vmul.f32 %v1619, %v1623
    %v1626 = vsel %vm53, %v1624, 0.0
    %1627 = vadd.xlane.f32.xlu0 %v1626
    %v1628 = vpop.xlane.xlu0 %1627
    %v1629 = vsel %vm53, %v1625, 0.0
    %1630 = vadd.xlane.f32.xlu0 %v1629
    %v1631 = vpop.xlane.xlu0 %1630
    %v1632 = vxor.u32 %v1628, 2147483648
    %v1633 = vxor.u32 %v1631, 2147483648
    %v1634 = vmul.f32 %v1632, 1.442695
    %v1635 = vpow.pop %v1634
    %v1636 = vmul.f32 %v1633, 1.442695
    %v1637 = vpow.pop %v1636
    %v1638 = vadd.f32 %v1635, 1.0
    %v1639 = vadd.f32 %v1637, 1.0
    %v1640 = vrcp.pop %v1638
    %v1641 = vmul.f32 1.0, %v1640
    %v1642 = vrcp.pop %v1639
    %v1643 = vmul.f32 1.0, %v1642
    %v1644 = vlaneseq
    %v1645 = vshrl.u32 %v1644, 7
    %v1646 = vsub.s32 0, %v1645
    %v1647 = vrot.slane %v1585, %v1646
    %v1648 = vmul.f32 %v1641, %v1647
    %v1649 = vmul.f32 %v1643, %v1647
    %v1650 = vadd.f32 %v1648, %v275
    %v1651 = vadd.f32 %v1649, %v275
    %v1652 = vadd.f32 %v1650, %v1588
    %v1653 = vadd.f32 %v1651, %v1589
    %s1654 = scalar_lea.vmem [#allocation2], 96
    %1655 = vst.msk [vmem:[%s1654] sm:$0xff] %vm53, %v1652
    %1656 = vst.msk [vmem:[%s1654 + $0x8] sm:$0xff] %vm53, %v1653
    %s1657 = scalar_lea.vmem %s0, 168
    %v1658 = vld [vmem:[%s1657] sm:$0x1]
    %v1659 = vsel %vm36, %v1658, 0.0
    %1660 = vadd.xlane.f32.xlu0 %v1659
    %v1661 = vpop.xlane.xlu0 %1660
    %v1662 = vmul.f32 %v1661, %v40
    %v1663 = vsub.f32 %v1658, %v1662
    %v1664 = vmul.f32 %v1663, %v1663
    %v1665 = vsel %vm36, %v1664, 0.0
    %1666 = vadd.xlane.f32.xlu0 %v1665
    %v1667 = vpop.xlane.xlu0 %1666
    %v1668 = vmul.f32 %v1667, %v40
    %v1669 = vadd.f32 %v1668, 1e-05
    %v1670 = vrsqrt.pop %v1669
    %v1671 = vmul.f32 %v1663, %v1670
    %v1672 = vmul.f32 %v1671, %v24
    %v1673 = vadd.f32 %v1672, %v25
    %v1675 = vsel %vm53, %v1673, 0
    %1677 = vmatprep.subr.mxu0 0.0
    %1678 = vmatpush1.msra.mxu0 %v27
    %1679 = vmatprep.subr.mxu0 0.0
    %1680 = vmatpush1.msra.mxu0 %v28
    %1681 = vmatprep.subr.mxu0 0.0
    %1682 = vmatpush1.msra.mxu0 %v29
    %1683 = vmatprep.subr.mxu0 0.0
    %1684 = vmatpush1.msra.mxu0 %v30
    %1685 = vmatprep.subr.mxu0 0.0
    %1686 = vmatpush1.msra.mxu0 0.0
    %1687 = vmatprep.subr.mxu0 0.0
    %1688 = vmatpush1.msra.mxu0 0.0
    %1689 = vmatprep.subr.mxu0 0.0
    %1690 = vmatpush1.msra.mxu0 0.0
    %1691 = vmatprep.subr.mxu0 0.0
    %1692 = vmatpush1.msra.mxu0 0.0
    %1693 = vmatprep.subr.mxu0 0.0
    %1694 = vmatpush1.msra.mxu0 0.0
    %1695 = vmatprep.subr.mxu0 0.0
    %1696 = vmatpush1.msra.mxu0 0.0
    %1697 = vmatprep.subr.mxu0 0.0
    %1698 = vmatpush1.msra.mxu0 0.0
    %1699 = vmatprep.subr.mxu0 0.0
    %1700 = vmatpush1.msra.mxu0 0.0
    %1701 = vmatprep.subr.mxu0 0.0
    %1702 = vmatpush1.msra.mxu0 0.0
    %1703 = vmatprep.subr.mxu0 0.0
    %1704 = vmatpush1.msra.mxu0 0.0
    %1705 = vmatprep.subr.mxu0 0.0
    %1706 = vmatpush1.msra.mxu0 0.0
    %1707 = vmatprep.subr.mxu0 0.0
    %1708 = vmatpush1.msra.mxu0 0.0
    %1709 = vmatprep.subr.mxu0 0.0
    %1710 = vmatpush1.msra.mxu0 0.0
    %1711 = vmatprep.subr.mxu0 0.0
    %1712 = vmatpush1.msra.mxu0 0.0
    %1713 = vmatprep.subr.mxu0 0.0
    %1714 = vmatpush1.msra.mxu0 0.0
    %1715 = vmatprep.subr.mxu0 0.0
    %1716 = vmatpush1.msra.mxu0 0.0
    %1717 = vmatprep.subr.mxu0 0.0
    %1718 = vmatpush1.msra.mxu0 0.0
    %1719 = vmatprep.subr.mxu0 0.0
    %1720 = vmatpush1.msra.mxu0 0.0
    %1721 = vmatprep.subr.mxu0 0.0
    %1722 = vmatpush1.msra.mxu0 0.0
    %1723 = vmatprep.subr.mxu0 0.0
    %1724 = vmatpush1.msra.mxu0 0.0
    %1725 = vmatprep.subr.mxu0 0.0
    %1726 = vmatpush1.msra.mxu0 0.0
    %1727 = vmatprep.subr.mxu0 0.0
    %1728 = vmatpush1.msra.mxu0 0.0
    %1729 = vmatprep.subr.mxu0 0.0
    %1730 = vmatpush1.msra.mxu0 0.0
    %1731 = vmatprep.subr.mxu0 0.0
    %1732 = vmatpush1.msra.mxu0 0.0
    %1733 = vmatprep.subr.mxu0 0.0
    %1734 = vmatpush1.msra.mxu0 0.0
    %1735 = vmatprep.subr.mxu0 0.0
    %1736 = vmatpush1.msra.mxu0 0.0
    %1737 = vmatprep.subr.mxu0 0.0
    %1738 = vmatpush1.msra.mxu0 0.0
    %1739 = vmatprep.subr.mxu0 0.0
    %1740 = vmatpush1.msra.mxu0 0.0
    %1741 = vmatprep.mubr.f32.mxu0 0.0
    %1742 = vmatmul.mubr.f32.gmra.mrb[0].mxu0 %v1675
    %v1743 = vpop.f32.mrb[0].mxu0
    %v1744 = vadd.f32 0.0, %v1743
    %v1745 = vpop.f32.mrb[0].mxu0
    %1746 = vdwg.mxu0
    %1747 = vmatprep.subr.mxu0 0.0
    %1748 = vmatpush1.msra.mxu0 %v31
    %1749 = vmatprep.subr.mxu0 0.0
    %1750 = vmatpush1.msra.mxu0 %v32
    %1751 = vmatprep.subr.mxu0 0.0
    %1752 = vmatpush1.msra.mxu0 %v33
    %1753 = vmatprep.subr.mxu0 0.0
    %1754 = vmatpush1.msra.mxu0 %v34
    %1755 = vmatprep.subr.mxu0 0.0
    %1756 = vmatpush1.msra.mxu0 0.0
    %1757 = vmatprep.subr.mxu0 0.0
    %1758 = vmatpush1.msra.mxu0 0.0
    %1759 = vmatprep.subr.mxu0 0.0
    %1760 = vmatpush1.msra.mxu0 0.0
    %1761 = vmatprep.subr.mxu0 0.0
    %1762 = vmatpush1.msra.mxu0 0.0
    %1763 = vmatprep.subr.mxu0 0.0
    %1764 = vmatpush1.msra.mxu0 0.0
    %1765 = vmatprep.subr.mxu0 0.0
    %1766 = vmatpush1.msra.mxu0 0.0
    %1767 = vmatprep.subr.mxu0 0.0
    %1768 = vmatpush1.msra.mxu0 0.0
    %1769 = vmatprep.subr.mxu0 0.0
    %1770 = vmatpush1.msra.mxu0 0.0
    %1771 = vmatprep.subr.mxu0 0.0
    %1772 = vmatpush1.msra.mxu0 0.0
    %1773 = vmatprep.subr.mxu0 0.0
    %1774 = vmatpush1.msra.mxu0 0.0
    %1775 = vmatprep.subr.mxu0 0.0
    %1776 = vmatpush1.msra.mxu0 0.0
    %1777 = vmatprep.subr.mxu0 0.0
    %1778 = vmatpush1.msra.mxu0 0.0
    %1779 = vmatprep.subr.mxu0 0.0
    %1780 = vmatpush1.msra.mxu0 0.0
    %1781 = vmatprep.subr.mxu0 0.0
    %1782 = vmatpush1.msra.mxu0 0.0
    %1783 = vmatprep.subr.mxu0 0.0
    %1784 = vmatpush1.msra.mxu0 0.0
    %1785 = vmatprep.subr.mxu0 0.0
    %1786 = vmatpush1.msra.mxu0 0.0
    %1787 = vmatprep.subr.mxu0 0.0
    %1788 = vmatpush1.msra.mxu0 0.0
    %1789 = vmatprep.subr.mxu0 0.0
    %1790 = vmatpush1.msra.mxu0 0.0
    %1791 = vmatprep.subr.mxu0 0.0
    %1792 = vmatpush1.msra.mxu0 0.0
    %1793 = vmatprep.subr.mxu0 0.0
    %1794 = vmatpush1.msra.mxu0 0.0
    %1795 = vmatprep.subr.mxu0 0.0
    %1796 = vmatpush1.msra.mxu0 0.0
    %1797 = vmatprep.subr.mxu0 0.0
    %1798 = vmatpush1.msra.mxu0 0.0
    %1799 = vmatprep.subr.mxu0 0.0
    %1800 = vmatpush1.msra.mxu0 0.0
    %1801 = vmatprep.subr.mxu0 0.0
    %1802 = vmatpush1.msra.mxu0 0.0
    %1803 = vmatprep.subr.mxu0 0.0
    %1804 = vmatpush1.msra.mxu0 0.0
    %1805 = vmatprep.subr.mxu0 0.0
    %1806 = vmatpush1.msra.mxu0 0.0
    %1807 = vmatprep.subr.mxu0 0.0
    %1808 = vmatpush1.msra.mxu0 0.0
    %1809 = vmatprep.subr.mxu0 0.0
    %1810 = vmatpush1.msra.mxu0 0.0
    %1811 = vmatprep.mubr.f32.mxu0 0.0
    %1812 = vmatmul.mubr.f32.gmra.mrb[0].mxu0 %v1675
    %v1813 = vpop.f32.mrb[0].mxu0
    %v1814 = vadd.f32 0.0, %v1813
    %v1815 = vpop.f32.mrb[0].mxu0
    %1816 = vdwg.mxu0
    %v1817 = vld [vmem:[%s1657 + $0x1] sm:$0xff]
    %v1818 = vld [vmem:[%s1657 + $0x9] sm:$0xff]
    %v1819 = vsel %vm53, %v1817, 0.0
    %1820 = vadd.xlane.f32.xlu0 %v1819
    %v1821 = vpop.xlane.xlu0 %1820
    %v1822 = vsel %vm53, %v1818, 0.0
    %1823 = vadd.xlane.f32.xlu0 %v1822
    %v1824 = vpop.xlane.xlu0 %1823
    %v1825 = vmul.f32 %v1821, %v40
    %v1826 = vmul.f32 %v1824, %v40
    %v1827 = vsub.f32 %v1817, %v1825
    %v1828 = vsub.f32 %v1818, %v1826
    %v1829 = vmul.f32 %v1827, %v1827
    %v1830 = vmul.f32 %v1828, %v1828
    %v1831 = vsel %vm53, %v1829, 0.0
    %1832 = vadd.xlane.f32.xlu0 %v1831
    %v1833 = vpop.xlane.xlu0 %1832
    %v1834 = vsel %vm53, %v1830, 0.0
    %1835 = vadd.xlane.f32.xlu0 %v1834
    %v1836 = vpop.xlane.xlu0 %1835
    %v1837 = vmul.f32 %v1833, %v40
    %v1838 = vmul.f32 %v1836, %v40
    %v1839 = vadd.f32 %v1837, 1e-05
    %v1840 = vadd.f32 %v1838, 1e-05
    %v1841 = vrsqrt.pop %v1839
    %v1842 = vrsqrt.pop %v1840
    %v1843 = vmul.f32 %v1827, %v1841
    %v1844 = vmul.f32 %v1828, %v1842
    %v1845 = vmul.f32 %v1843, %v229
    %v1846 = vmul.f32 %v1844, %v229
    %v1847 = vadd.f32 %v1845, %v237
    %v1848 = vadd.f32 %v1846, %v237
    %v1849 = vlaneseq
    %v1850 = vshrl.u32 %v1849, 7
    %v1851 = vsub.s32 0, %v1850
    %v1852 = vrot.slane %v1744, %v1851
    %v1853 = vmul.f32 %v1847, %v1852
    %v1854 = vmul.f32 %v1848, %v1852
    %v1855 = vsel %vm53, %v1853, 0.0
    %1856 = vadd.xlane.f32.xlu0 %v1855
    %v1857 = vpop.xlane.xlu0 %1856
    %v1858 = vsel %vm53, %v1854, 0.0
    %1859 = vadd.xlane.f32.xlu0 %v1858
    %v1860 = vpop.xlane.xlu0 %1859
    %v1861 = vxor.u32 %v1857, 2147483648
    %v1862 = vxor.u32 %v1860, 2147483648
    %v1863 = vmul.f32 %v1861, 1.442695
    %v1864 = vpow.pop %v1863
    %v1865 = vmul.f32 %v1862, 1.442695
    %v1866 = vpow.pop %v1865
    %v1867 = vadd.f32 %v1864, 1.0
    %v1868 = vadd.f32 %v1866, 1.0
    %v1869 = vrcp.pop %v1867
    %v1870 = vmul.f32 1.0, %v1869
    %v1871 = vrcp.pop %v1868
    %v1872 = vmul.f32 1.0, %v1871
    %v1873 = vlaneseq
    %v1874 = vshrl.u32 %v1873, 7
    %v1875 = vsub.s32 0, %v1874
    %v1876 = vrot.slane %v1814, %v1875
    %v1877 = vmul.f32 %v1870, %v1876
    %v1878 = vmul.f32 %v1872, %v1876
    %v1879 = vadd.f32 %v1877, %v275
    %v1880 = vadd.f32 %v1878, %v275
    %v1881 = vadd.f32 %v1879, %v1817
    %v1882 = vadd.f32 %v1880, %v1818
    %s1883 = scalar_lea.vmem [#allocation2], 112
    %1884 = vst.msk [vmem:[%s1883] sm:$0xff] %vm53, %v1881
    %1885 = vst.msk [vmem:[%s1883 + $0x8] sm:$0xff] %vm53, %v1882
    // Predicated region
    $region26: #{tpu_custom_call.1} parent=1 // pred_check
      _
    $region27: #{tpu_custom_call.1} parent=1 // pred_check_branch
      %1887 = sbr.rel (0) target = $region29
    $region28: #{tpu_custom_call.1} parent=1 // pred_region
      %s1889 = ssub.s32 2048, 2048
      %1890 = vsyncadd [#allocation3], %s1889
      %s1891 = sshll.u32 [#allocation2], 4
      %s1892 = int_to_ptr.vmem [resolvable:$true] %s1891
      %1897 = dma.vmem_to_hbm [thread:$0]  %s1892, 2048, %s6, [#allocation3], 128, 128, 8
    $region29: #{tpu_custom_call.1} parent=1 // pred_fallthru
      _
    // Predicated region
    $region30: #{tpu_custom_call.1} parent=1 // pred_check
      _
    $region31: #{tpu_custom_call.1} parent=1 // pred_check_branch
      %1899 = sbr.rel (0) target = $region33
    $region32: #{tpu_custom_call.1} parent=1 // pred_region
      %1900 = dma.done [#allocation3], 2048
    $region33: #{tpu_custom_call.1} parent=1 // pred_fallthru
      _
    %1901 = vsyncpa [#allocation3], 1

</llo_original>
